<compile_context>
chip_gen: v7x
topology: tpu7x:2x2x1
jax: 0.10.0
libtpu: 0.0.40
codegen_flags: <defaults>
</compile_context>

<pallas_src>
import math
from functools import partial

import jax
import jax.numpy as jnp
from jax.experimental import pallas as pl
from jax.experimental.pallas import tpu as pltpu


# ---------------------------------------------------------------------------
# Small helpers
# ---------------------------------------------------------------------------
def _round_up(x, m):
    return ((x + m - 1) // m) * m


def _cdiv(a, b):
    return (a + b - 1) // b


_VMEM_CFG = None


def _vmem_config():
    """(tile budget, vmem_limit_bytes), generation-aware with a safe fallback."""
    global _VMEM_CFG
    if _VMEM_CFG is None:
        cap = None
        try:
            cap = int(getattr(pltpu.get_tpu_info(), "vmem_capacity_bytes", 0)) or None
        except Exception:
            cap = None
        if cap is None:
            cfg = (12 << 20, 20 << 20)          # unknown: v5e-safe
        elif cap >= (96 << 20):
            cfg = (24 << 20, 34 << 20)          # v5e / v6e (128 MiB physical)
        elif cap >= (48 << 20):
            cfg = (20 << 20, 28 << 20)          # v7x (64 MiB per TC)
        else:
            cfg = (10 << 20, 16 << 20)
        _VMEM_CFG = cfg
    return _VMEM_CFG


# ---------------------------------------------------------------------------
# Pallas kernels: fused  W @ A^T + bias  (+ optional LeakyReLU)
# ---------------------------------------------------------------------------
def _apply_bias_act(acc, bias, negative_slope):
    r = acc + bias                      # bias is (Cout, 1): broadcasts on lanes
    if negative_slope is not None:
        r = jnp.where(r >= 0, r, negative_slope * r)
    return r


def _fused_kernel_single_k(w_ref, at_ref, b_ref, o_ref, *, negative_slope):
    acc = jnp.dot(w_ref[...], at_ref[...], preferred_element_type=jnp.float32)
    o_ref[...] = _apply_bias_act(acc, b_ref[...], negative_slope)


def _fused_kernel_k_tiled(w_ref, at_ref, b_ref, o_ref, *, negative_slope):
    # f32 output block is resident across the "arbitrary" K axis: accumulate
    # directly into it (no scratch).
    j = pl.program_id(1)

    @pl.when(j == 0)
    def _():
        o_ref[...] = jnp.zeros_like(o_ref)

    o_ref[...] += jnp.dot(w_ref[...], at_ref[...],
                          preferred_element_type=jnp.float32)

    @pl.when(j == pl.num_programs(1) - 1)
    def _():
        o_ref[...] = _apply_bias_act(o_ref[...], b_ref[...], negative_slope)


def _pick_tiles(cout, k, m, budget):
    # K tile: full-extent when it fits; otherwise a lane-aligned divisor so the
    # K zero-pad path stays cold.
    if k <= 2048:
        tk = k
    elif k % 2048 == 0:
        tk = 2048
    elif k % 1024 == 0:
        tk = 1024
    else:
        tk = 2048                       # cold path: triggers K zero-pad
    # M tile: biggest lane-aligned tile fitting the (double-buffered) budget.
    tm = 128
    for cand in (32768, 16384, 8192, 4096, 2048, 1024, 512, 256, 128):
        step = (2 * tk * cand * 2 +     # A^T blocks (bf16, double-buffered)
                2 * cout * tk * 2 +     # W blocks (bf16)
                2 * cout * cand * 4 +   # output blocks (f32, resident/dbl)
                cout * 4)               # bias
        if step <= budget:
            tm = cand
            break
    tm = min(tm, _round_up(m, 128))
    return tm, tk


def matmul_t_bias_act(w, at, bias2d, *, negative_slope=None):
    """w: (Cout, K) bf16, at: (K, M) bf16, bias2d: (Cout, 1) f32.

    Returns f32 (Cout, M) = w @ at + bias [+ LeakyReLU].  Lane-dense: the big
    M dimension maps to the TPU lane axis; M is NOT padded (boundary blocks
    are masked by Pallas), the K axis is zero-padded only when it does not
    divide the K tile.
    """
    cout, k = w.shape
    k2, m = at.shape
    assert k == k2
    budget, vlimit = _vmem_config()
    tm, tk = _pick_tiles(cout, k, m, budget)

    w_p = w if w.dtype == jnp.bfloat16 else w.astype(jnp.bfloat16)
    at_p = at if at.dtype == jnp.bfloat16 else at.astype(jnp.bfloat16)
    b_p = bias2d if bias2d.dtype == jnp.float32 else bias2d.astype(jnp.float32)

    if k % tk != 0:
        # Contraction axis must be exactly padded with zeros (review concern).
        k_pad = _round_up(k, tk)
        w_p = jnp.pad(w_p, ((0, 0), (0, k_pad - k)))
        at_p = jnp.pad(at_p, ((0, k_pad - k), (0, 0)))
        k = k_pad

    n_m = _cdiv(m, tm)
    n_k = k // tk

    if n_k == 1:
        out = pl.pallas_call(
            partial(_fused_kernel_single_k, negative_slope=negative_slope),
            out_shape=jax.ShapeDtypeStruct((cout, m), jnp.float32),
            grid_spec=pltpu.PrefetchScalarGridSpec(
                num_scalar_prefetch=0,
                grid=(n_m,),
                in_specs=[
                    pl.BlockSpec((cout, k), lambda i: (0, 0)),
                    pl.BlockSpec((k, tm), lambda i: (0, i)),
                    pl.BlockSpec((cout, 1), lambda i: (0, 0)),
                ],
                out_specs=pl.BlockSpec((cout, tm), lambda i: (0, i)),
            ),
            compiler_params=pltpu.CompilerParams(
                dimension_semantics=("parallel",),
                vmem_limit_bytes=vlimit),
        )(w_p, at_p, b_p)
    else:
        out = pl.pallas_call(
            partial(_fused_kernel_k_tiled, negative_slope=negative_slope),
            out_shape=jax.ShapeDtypeStruct((cout, m), jnp.float32),
            grid_spec=pltpu.PrefetchScalarGridSpec(
                num_scalar_prefetch=0,
                grid=(n_m, n_k),
                in_specs=[
                    pl.BlockSpec((cout, tk), lambda i, j: (0, j)),
                    pl.BlockSpec((tk, tm), lambda i, j: (j, i)),
                    pl.BlockSpec((cout, 1), lambda i, j: (0, 0)),
                ],
                out_specs=pl.BlockSpec((cout, tm), lambda i, j: (0, i)),
            ),
            compiler_params=pltpu.CompilerParams(
                dimension_semantics=("parallel", "arbitrary"),
                vmem_limit_bytes=vlimit),
        )(w_p, at_p, b_p)
    return out


# ---------------------------------------------------------------------------
# Pallas kernel: final Linear as a lane-dense GEMV reduction (no M padding)
# ---------------------------------------------------------------------------
def _linear_kernel(x_ref, w_ref, b_ref, o_ref):
    j = pl.program_id(0)

    @pl.when(j == 0)
    def _():
        o_ref[...] = jnp.zeros_like(o_ref)

    o_ref[...] += jnp.sum(x_ref[...] * w_ref[...], axis=1, keepdims=True)

    @pl.when(j == pl.num_programs(0) - 1)
    def _():
        o_ref[...] = o_ref[...] + b_ref[...]


def linear_cnhw(x_cnhw, lw, lb2d):
    """x_cnhw: (C, N, H, W) f32, lw: (1, C*H*W) f32, lb2d: (1, 1) f32 -> (N, 1)."""
    C, Nb, H, W = x_cnhw.shape
    k = C * H * W
    # torch Flatten on NCHW: feature index = c*H*W + h*W + w.
    flat = x_cnhw.transpose(1, 0, 2, 3).reshape(Nb, k)
    _, vlimit = _vmem_config()

    lw_p = lw.astype(jnp.float32)
    tk = math.gcd(k, 2048)
    if tk < 128:                         # cold path: zero-pad contraction axis
        tk = 512
        k_pad = _round_up(k, tk)
        flat = jnp.pad(flat, ((0, 0), (0, k_pad - k)))
        lw_p = jnp.pad(lw_p, ((0, 0), (0, k_pad - k)))
        k = k_pad
    n_k = k // tk

    out = pl.pallas_call(
        _linear_kernel,
        out_shape=jax.ShapeDtypeStruct((Nb, 1), jnp.float32),
        grid_spec=pltpu.PrefetchScalarGridSpec(
            num_scalar_prefetch=0,
            grid=(n_k,),
            in_specs=[
                pl.BlockSpec((Nb, tk), lambda j: (0, j)),
                pl.BlockSpec((1, tk), lambda j: (0, j)),
                pl.BlockSpec((1, 1), lambda j: (0, 0)),
            ],
            out_specs=pl.BlockSpec((Nb, 1), lambda j: (0, 0)),
        ),
        compiler_params=pltpu.CompilerParams(
            dimension_semantics=("arbitrary",),
            vmem_limit_bytes=vlimit),
    )(flat, lw_p, lb2d)
    return out


# ---------------------------------------------------------------------------
# Conv2d(kernel=4, stride=2, padding=1) + LeakyReLU(0.2) in (C, N, H, W) layout
# via space-to-depth (k=2, s=1 meta-conv) feeding the fused matmul kernel.
# ---------------------------------------------------------------------------
def conv2d_leaky_cnhw(x_cnhw, wf_bf16, b2d, *, negative_slope=0.2):
    """x_cnhw: (C, N, H, W) f32; wf_bf16: (Cout, C*16) pre-repacked bf16
    (K order = cin*16 + dh*8 + dw*4 + qh*2 + qw); b2d: (Cout, 1) f32.
    Returns (Cout, N, Ho, Wo) f32 — directly the next layer's input layout."""
    C, Nb, H, W = x_cnhw.shape
    Cout = wf_bf16.shape[0]
    Ho = (H + 2 - 4) // 2 + 1
    Wo = (W + 2 - 4) // 2 + 1
    Hs, Ws = Ho + 1, Wo + 1
    pad_bottom = 2 * Hs - (H + 1)        # >= 0; top/left pad is always 1
    pad_right = 2 * Ws - (W + 1)

    xp = jnp.pad(x_cnhw, ((0, 0), (0, 0), (1, pad_bottom), (1, pad_right)))
    # Space-to-depth: xs[c*4 + dh*2 + dw, n, h2, w2] = xp[c, n, 2*h2+dh, 2*w2+dw]
    xs = xp.reshape(C, Nb, Hs, 2, Ws, 2).transpose(0, 3, 5, 1, 2, 4)
    xs = xs.reshape(C * 4, Nb, Hs, Ws).astype(jnp.bfloat16)

    # 4 unit-stride tap slices of the k=2,s=1 meta-conv (dense reads).
    taps = []
    for qh in range(2):
        for qw in range(2):
            taps.append(xs[:, :, qh:qh + Ho, qw:qw + Wo])
    at = jnp.stack(taps, axis=1).reshape(C * 16, Nb * Ho * Wo)

    y = matmul_t_bias_act(wf_bf16, at, b2d, negative_slope=negative_slope)
    return y.reshape(Cout, Nb, Ho, Wo)


# ---------------------------------------------------------------------------
# Parameter construction mirroring Discriminator.build_net(sizes)
# ---------------------------------------------------------------------------
def build_discriminator_params(sizes, key):
    C, W, H = sizes[0], sizes[1], sizes[2]
    convs = []
    while H >= 32 and W >= 32:
        key, k1, k2 = jax.random.split(key, 3)
        fan_in = C * 4 * 4
        bound = 1.0 / math.sqrt(fan_in)
        w = jax.random.uniform(k1, (2 * C, C, 4, 4), jnp.float32, -bound, bound)
        b = jax.random.uniform(k2, (2 * C,), jnp.float32, -bound, bound)
        convs.append((w, b))
        C *= 2
        H = max(1, math.floor(H / 2))
        W = max(1, math.floor(W / 2))
    key, k1, k2 = jax.random.split(key, 3)
    in_features = C * H * W
    bound = 1.0 / math.sqrt(in_features)
    lw = jax.random.uniform(k1, (1, in_features), jnp.float32, -bound, bound)
    lb = jax.random.uniform(k2, (1,), jnp.float32, -bound, bound)
    return convs, (lw, lb)


def _repack_conv_weight(w):
    """(Cout, Cin, 4, 4) OIHW f32 -> (Cout, Cin*16) bf16 in s2d K order."""
    Cout, Cin, _, _ = w.shape
    w6 = w.reshape(Cout, Cin, 2, 2, 2, 2)       # (cout, cin, qh, dh, qw, dw)
    w6 = w6.transpose(0, 1, 3, 5, 2, 4)         # (cout, cin, dh, dw, qh, qw)
    return w6.reshape(Cout, Cin * 16).astype(jnp.bfloat16)


def prepack_params(convs, linear):
    """Pre-cast / pre-flatten all weights once (outside the forward pass)."""
    packed_convs = [(_repack_conv_weight(w),
                     b.reshape(-1, 1).astype(jnp.float32)) for (w, b) in convs]
    lw, lb = linear
    return packed_convs, (lw.astype(jnp.float32),
                          lb.reshape(1, 1).astype(jnp.float32))


def discriminator_forward(x_nchw, packed_convs, packed_linear):
    x = jnp.transpose(x_nchw, (1, 0, 2, 3))      # NCHW -> (C, N, H, W)
    for wf, b2 in packed_convs:
        x = conv2d_leaky_cnhw(x, wf, b2)
    lw, lb2 = packed_linear
    return linear_cnhw(x, lw, lb2)               # (N, 1)


# ---------------------------------------------------------------------------
# Reference (same bf16 conv matmul inputs, f32 accumulation / f32 linear)
# ---------------------------------------------------------------------------
def reference_forward(x, convs, linear):
    a = x
    for w, b in convs:
        a = jax.lax.conv_general_dilated(
            a.astype(jnp.bfloat16), w.astype(jnp.bfloat16),
            window_strides=(2, 2), padding=((1, 1), (1, 1)),
            dimension_numbers=("NCHW", "OIHW", "NCHW"),
            preferred_element_type=jnp.float32)
        a = a + b[None, :, None, None]
        a = jnp.where(a >= 0, a, 0.2 * a)
    lw, lb = linear
    flat = a.reshape(a.shape[0], -1)
    return flat @ lw.T + lb


# ---------------------------------------------------------------------------
if __name__ == "__main__":
    # Small version of the default sizes=(4, 512, 704): channels=4, W=H=64
    # -> two conv blocks (4->8->16 channels), 16x16 spatial, Linear(4096, 1).
    sizes = (4, 64, 64)
    batch = 2

    key = jax.random.PRNGKey(0)
    pkey, xkey = jax.random.split(key)
    convs, linear = build_discriminator_params(sizes, pkey)
    packed_convs, packed_linear = prepack_params(convs, linear)

    # NCHW input: (batch, channels, height, width)
    x = jax.random.normal(xkey, (batch, sizes[0], sizes[2], sizes[1]),
                          jnp.float32)

    fwd = jax.jit(lambda xx: discriminator_forward(xx, packed_convs,
                                                   packed_linear))
    out = jax.block_until_ready(fwd(x))

    ref = reference_forward(x, convs, linear)

    assert out.shape == (batch, 1)
    assert jnp.allclose(out, ref, rtol=1e-2, atol=1e-2), (out, ref)
    print("KERNEL_OK")
</pallas_src>

<mosaic_0001>
module attributes {stable_mosaic.version = 11 : i64} {
  func.func @_fused_kernel_single_k(%arg0: i32, %arg1: memref<8x64xbf16, #tpu.memory_space<vmem>>, %arg2: memref<64x2048xbf16, #tpu.memory_space<vmem>>, %arg3: memref<8x1xf32, #tpu.memory_space<vmem>>, %arg4: memref<8x2048xf32, #tpu.memory_space<vmem>>) attributes {dimension_semantics = [#tpu.dimension_semantics<parallel>], iteration_bounds = array<i64: 1>, scalar_prefetch = 0 : i64, scratch_operands = 0 : i64, tpu.core_type = #tpu.core_type<tc>, window_params = [{pipeline_mode = #tpu.pipeline_mode<synchronous>, transform_indices = @transform_0, window_bounds = array<i64: 8, 64>}, {transform_indices = @transform_1, window_bounds = array<i64: 64, 2048>}, {pipeline_mode = #tpu.pipeline_mode<synchronous>, transform_indices = @transform_2, window_bounds = array<i64: 8, 1>}, {transform_indices = @transform_3, window_bounds = array<i64: 8, 2048>}]} {
    %c0 = arith.constant 0 : index
    %c0_0 = arith.constant 0 : index
    %0 = vector.load %arg1[%c0, %c0_0] : memref<8x64xbf16, #tpu.memory_space<vmem>>, vector<8x64xbf16>
    %c0_1 = arith.constant 0 : index
    %c0_2 = arith.constant 0 : index
    %1 = vector.load %arg2[%c0_1, %c0_2] : memref<64x2048xbf16, #tpu.memory_space<vmem>>, vector<64x2048xbf16>
    %cst = arith.constant dense<0.000000e+00> : vector<8x2048xf32>
    %2 = tpu.matmul %0, %1, %cst {dimension_numbers = #tpu.dot_dimension_numbers<[1], [0], [0], [1], [0, 0, 1, 1], [], []>} : vector<8x64xbf16>, vector<64x2048xbf16>, vector<8x2048xf32> -> vector<8x2048xf32>
    %c0_3 = arith.constant 0 : index
    %c0_4 = arith.constant 0 : index
    %3 = vector.load %arg3[%c0_3, %c0_4] : memref<8x1xf32, #tpu.memory_space<vmem>>, vector<8x1xf32>
    %4 = vector.broadcast %3 : vector<8x1xf32> to vector<8x2048xf32>
    %5 = arith.addf %2, %4 : vector<8x2048xf32>
    %cst_5 = arith.constant 0.000000e+00 : f32
    %6 = vector.broadcast %cst_5 : f32 to vector<8x2048xf32>
    %7 = arith.cmpf oge, %5, %6 : vector<8x2048xf32>
    %cst_6 = arith.constant 2.000000e-01 : f32
    %8 = vector.broadcast %cst_6 : f32 to vector<8x2048xf32>
    %9 = arith.mulf %8, %5 : vector<8x2048xf32>
    %10 = arith.select %7, %5, %9 : vector<8x2048xi1>, vector<8x2048xf32>
    %c0_7 = arith.constant 0 : index
    %c0_8 = arith.constant 0 : index
    %11 = vector.load %arg4[%c0_7, %c0_8] : memref<8x2048xf32, #tpu.memory_space<vmem>>, vector<8x2048xf32>
    tpu.vector_store %arg4[%c0_7, %c0_8], %10 {strides = array<i32>} : memref<8x2048xf32, #tpu.memory_space<vmem>>, vector<8x2048xf32>,
    return
  }
  func.func @transform_0(%arg0: i32) -> (i32, i32) {
    %c0_i32 = arith.constant 0 : i32
    %c0_i32_0 = arith.constant 0 : i32
    %c0_i32_1 = arith.constant 0 : i32
    return %c0_i32, %c0_i32_0 : i32, i32
  }
  func.func @transform_1(%arg0: i32) -> (i32, i32) {
    %c0_i32 = arith.constant 0 : i32
    %c0_i32_0 = arith.constant 0 : i32
    return %c0_i32, %arg0 : i32, i32
  }
  func.func @transform_2(%arg0: i32) -> (i32, i32) {
    %c0_i32 = arith.constant 0 : i32
    %c0_i32_0 = arith.constant 0 : i32
    %c0_i32_1 = arith.constant 0 : i32
    return %c0_i32, %c0_i32_0 : i32, i32
  }
  func.func @transform_3(%arg0: i32) -> (i32, i32) {
    %c0_i32 = arith.constant 0 : i32
    %c0_i32_0 = arith.constant 0 : i32
    return %c0_i32, %arg0 : i32, i32
  }
}

module attributes {stable_mosaic.version = 11 : i64} {
  func.func @_fused_kernel_single_k(%arg0: i32, %arg1: memref<16x128xbf16, #tpu.memory_space<vmem>>, %arg2: memref<128x512xbf16, #tpu.memory_space<vmem>>, %arg3: memref<16x1xf32, #tpu.memory_space<vmem>>, %arg4: memref<16x512xf32, #tpu.memory_space<vmem>>) attributes {dimension_semantics = [#tpu.dimension_semantics<parallel>], iteration_bounds = array<i64: 1>, scalar_prefetch = 0 : i64, scratch_operands = 0 : i64, tpu.core_type = #tpu.core_type<tc>, window_params = [{pipeline_mode = #tpu.pipeline_mode<synchronous>, transform_indices = @transform_0, window_bounds = array<i64: 16, 128>}, {transform_indices = @transform_1, window_bounds = array<i64: 128, 512>}, {pipeline_mode = #tpu.pipeline_mode<synchronous>, transform_indices = @transform_2, window_bounds = array<i64: 16, 1>}, {transform_indices = @transform_3, window_bounds = array<i64: 16, 512>}]} {
    %c0 = arith.constant 0 : index
    %c0_0 = arith.constant 0 : index
    %0 = vector.load %arg1[%c0, %c0_0] : memref<16x128xbf16, #tpu.memory_space<vmem>>, vector<16x128xbf16>
    %c0_1 = arith.constant 0 : index
    %c0_2 = arith.constant 0 : index
    %1 = vector.load %arg2[%c0_1, %c0_2] : memref<128x512xbf16, #tpu.memory_space<vmem>>, vector<128x512xbf16>
    %cst = arith.constant dense<0.000000e+00> : vector<16x512xf32>
    %2 = tpu.matmul %0, %1, %cst {dimension_numbers = #tpu.dot_dimension_numbers<[1], [0], [0], [1], [0, 0, 1, 1], [], []>} : vector<16x128xbf16>, vector<128x512xbf16>, vector<16x512xf32> -> vector<16x512xf32>
    %c0_3 = arith.constant 0 : index
    %c0_4 = arith.constant 0 : index
    %3 = vector.load %arg3[%c0_3, %c0_4] : memref<16x1xf32, #tpu.memory_space<vmem>>, vector<16x1xf32>
    %4 = vector.broadcast %3 : vector<16x1xf32> to vector<16x512xf32>
    %5 = arith.addf %2, %4 : vector<16x512xf32>
    %cst_5 = arith.constant 0.000000e+00 : f32
    %6 = vector.broadcast %cst_5 : f32 to vector<16x512xf32>
    %7 = arith.cmpf oge, %5, %6 : vector<16x512xf32>
    %cst_6 = arith.constant 2.000000e-01 : f32
    %8 = vector.broadcast %cst_6 : f32 to vector<16x512xf32>
    %9 = arith.mulf %8, %5 : vector<16x512xf32>
    %10 = arith.select %7, %5, %9 : vector<16x512xi1>, vector<16x512xf32>
    %c0_7 = arith.constant 0 : index
    %c0_8 = arith.constant 0 : index
    %11 = vector.load %arg4[%c0_7, %c0_8] : memref<16x512xf32, #tpu.memory_space<vmem>>, vector<16x512xf32>
    tpu.vector_store %arg4[%c0_7, %c0_8], %10 {strides = array<i32>} : memref<16x512xf32, #tpu.memory_space<vmem>>, vector<16x512xf32>,
    return
  }
  func.func @transform_0(%arg0: i32) -> (i32, i32) {
    %c0_i32 = arith.constant 0 : i32
    %c0_i32_0 = arith.constant 0 : i32
    %c0_i32_1 = arith.constant 0 : i32
    return %c0_i32, %c0_i32_0 : i32, i32
  }
  func.func @transform_1(%arg0: i32) -> (i32, i32) {
    %c0_i32 = arith.constant 0 : i32
    %c0_i32_0 = arith.constant 0 : i32
    return %c0_i32, %arg0 : i32, i32
  }
  func.func @transform_2(%arg0: i32) -> (i32, i32) {
    %c0_i32 = arith.constant 0 : i32
    %c0_i32_0 = arith.constant 0 : i32
    %c0_i32_1 = arith.constant 0 : i32
    return %c0_i32, %c0_i32_0 : i32, i32
  }
  func.func @transform_3(%arg0: i32) -> (i32, i32) {
    %c0_i32 = arith.constant 0 : i32
    %c0_i32_0 = arith.constant 0 : i32
    return %c0_i32, %arg0 : i32, i32
  }
}

module attributes {stable_mosaic.version = 11 : i64} {
  func.func @_linear_kernel(%arg0: i32, %arg1: memref<2x2048xf32, #tpu.memory_space<vmem>>, %arg2: memref<1x2048xf32, #tpu.memory_space<vmem>>, %arg3: memref<1x1xf32, #tpu.memory_space<vmem>>, %arg4: memref<2x1xf32, #tpu.memory_space<vmem>>) attributes {dimension_semantics = [#tpu.dimension_semantics<arbitrary>], iteration_bounds = array<i64: 2>, scalar_prefetch = 0 : i64, scratch_operands = 0 : i64, tpu.core_type = #tpu.core_type<tc>, window_params = [{transform_indices = @transform_0, window_bounds = array<i64: 2, 2048>}, {transform_indices = @transform_1, window_bounds = array<i64: 1, 2048>}, {pipeline_mode = #tpu.pipeline_mode<synchronous>, transform_indices = @transform_2, window_bounds = array<i64: 1, 1>}, {pipeline_mode = #tpu.pipeline_mode<synchronous>, transform_indices = @transform_3, window_bounds = array<i64: 2, 1>}]} {
    %c0_i32 = arith.constant 0 : i32
    %0 = arith.cmpi eq, %arg0, %c0_i32 : i32
    %1 = arith.extui %0 : i1 to i32
    %c0_i32_0 = arith.constant 0 : i32
    %2 = arith.cmpi ne, %1, %c0_i32_0 : i32
    scf.if %2 {
      %cst_9 = arith.constant 0.000000e+00 : f32
      %15 = vector.broadcast %cst_9 : f32 to vector<2x1xf32>
      %c0_10 = arith.constant 0 : index
      %c0_11 = arith.constant 0 : index
      %16 = vector.load %arg4[%c0_10, %c0_11] : memref<2x1xf32, #tpu.memory_space<vmem>>, vector<2x1xf32>
      tpu.vector_store %arg4[%c0_10, %c0_11], %15 {strides = array<i32>} : memref<2x1xf32, #tpu.memory_space<vmem>>, vector<2x1xf32>,
    } else {
    }
    %c0 = arith.constant 0 : index
    %c0_1 = arith.constant 0 : index
    %3 = vector.load %arg4[%c0, %c0_1] : memref<2x1xf32, #tpu.memory_space<vmem>>, vector<2x1xf32>
    %c0_2 = arith.constant 0 : index
    %c0_3 = arith.constant 0 : index
    %4 = vector.load %arg1[%c0_2, %c0_3] : memref<2x2048xf32, #tpu.memory_space<vmem>>, vector<2x2048xf32>
    %c0_4 = arith.constant 0 : index
    %c0_5 = arith.constant 0 : index
    %5 = vector.load %arg2[%c0_4, %c0_5] : memref<1x2048xf32, #tpu.memory_space<vmem>>, vector<1x2048xf32>
    %6 = vector.broadcast %5 : vector<1x2048xf32> to vector<2x2048xf32>
    %7 = arith.mulf %4, %6 : vector<2x2048xf32>
    %cst = arith.constant dense<0.000000e+00> : vector<2xf32>
    %8 = vector.multi_reduction <add>, %7, %cst [1] : vector<2x2048xf32> to vector<2xf32>
    %9 = vector.shape_cast %8 : vector<2xf32> to vector<2x1xf32>
    %10 = arith.addf %3, %9 : vector<2x1xf32>
    %c0_6 = arith.constant 0 : index
    %c0_7 = arith.constant 0 : index
    %11 = vector.load %arg4[%c0_6, %c0_7] : memref<2x1xf32, #tpu.memory_space<vmem>>, vector<2x1xf32>
    tpu.vector_store %arg4[%c0_6, %c0_7], %10 {strides = array<i32>} : memref<2x1xf32, #tpu.memory_space<vmem>>, vector<2x1xf32>,
    %c1_i32 = arith.constant 1 : i32
    %12 = arith.cmpi eq, %arg0, %c1_i32 : i32
    %13 = arith.extui %12 : i1 to i32
    %c0_i32_8 = arith.constant 0 : i32
    %14 = arith.cmpi ne, %13, %c0_i32_8 : i32
    scf.if %14 {
      %c0_9 = arith.constant 0 : index
      %c0_10 = arith.constant 0 : index
      %15 = vector.load %arg4[%c0_9, %c0_10] : memref<2x1xf32, #tpu.memory_space<vmem>>, vector<2x1xf32>
      %c0_11 = arith.constant 0 : index
      %c0_12 = arith.constant 0 : index
      %16 = vector.load %arg3[%c0_11, %c0_12] : memref<1x1xf32, #tpu.memory_space<vmem>>, vector<1x1xf32>
      %17 = vector.broadcast %16 : vector<1x1xf32> to vector<2x1xf32>
      %18 = arith.addf %15, %17 : vector<2x1xf32>
      %c0_13 = arith.constant 0 : index
      %c0_14 = arith.constant 0 : index
      %19 = vector.load %arg4[%c0_13, %c0_14] : memref<2x1xf32, #tpu.memory_space<vmem>>, vector<2x1xf32>
      tpu.vector_store %arg4[%c0_13, %c0_14], %18 {strides = array<i32>} : memref<2x1xf32, #tpu.memory_space<vmem>>, vector<2x1xf32>,
    } else {
    }
    return
  }
  func.func @transform_0(%arg0: i32) -> (i32, i32) {
    %c0_i32 = arith.constant 0 : i32
    %c0_i32_0 = arith.constant 0 : i32
    return %c0_i32, %arg0 : i32, i32
  }
  func.func @transform_1(%arg0: i32) -> (i32, i32) {
    %c0_i32 = arith.constant 0 : i32
    %c0_i32_0 = arith.constant 0 : i32
    return %c0_i32, %arg0 : i32, i32
  }
  func.func @transform_2(%arg0: i32) -> (i32, i32) {
    %c0_i32 = arith.constant 0 : i32
    %c0_i32_0 = arith.constant 0 : i32
    %c0_i32_1 = arith.constant 0 : i32
    return %c0_i32, %c0_i32_0 : i32, i32
  }
  func.func @transform_3(%arg0: i32) -> (i32, i32) {
    %c0_i32 = arith.constant 0 : i32
    %c0_i32_0 = arith.constant 0 : i32
    %c0_i32_1 = arith.constant 0 : i32
    return %c0_i32, %c0_i32_0 : i32, i32
  }
}

</mosaic_0001>

<llo_original>
// kernel: _lambda_.3
$region0: #{_lambda_.3}
  #allocation0 [shape = 'u32[]', space=smem, size = 0x4, offset = 0x4, fixed_abs, tag = 'smem constant byte address 0x4 - core index']
  #allocation1 [shape = 'u32[144,128]{1,0:T(1,128)}', space=vmem, size = 0x12000, scoped, tag = 'internal scratch']
  %s0 = inlined_call_operand.vmem [shape: bf16[8,64], index: 0, kind: input, shape index: {}]
  %s1 = inlined_call_operand.vmem [shape: bf16[64,2048], index: 1, kind: input, shape index: {}]
  %s2 = inlined_call_operand.vmem [shape: f32[8,1], index: 2, kind: input, shape index: {}]
  %s3 = inlined_call_operand.vmem [shape: f32[8,2048], index: 3, kind: output, shape index: {}]
  %s4 = sld [smem:[#allocation0]]
  $region22: #{_lambda_.3} parent=0
    _
  %s6 = ssub.s32 1, %s4
  %s7 = scalar_select 0, %s6, %s4
  // Predicated region
  $region2: #{_lambda_.3} parent=0 // pred_check
    _
  $region3: #{_lambda_.3} parent=0 // pred_check_branch
    %9 = sbr.rel (0) target = $region5
  $region4: #{_lambda_.3} parent=0 // pred_region
    _
  $region5: #{_lambda_.3} parent=0 // pred_fallthru
    _
  // Predicated region
  $region6: #{_lambda_.3} parent=0 // pred_check
    _
  $region7: #{_lambda_.3} parent=0 // pred_check_branch
    %11 = sbr.rel (0) target = $region9
  $region8: #{_lambda_.3} parent=0 // pred_region
    _
  $region9: #{_lambda_.3} parent=0 // pred_fallthru
    _
  // Predicated region
  $region10: #{_lambda_.3} parent=0 // pred_check
    _
  $region11: #{_lambda_.3} parent=0 // pred_check_branch
    %13 = sbr.rel (0) target = $region13
  $region12: #{_lambda_.3} parent=0 // pred_region
    _
  $region13: #{_lambda_.3} parent=0 // pred_fallthru
    _
  %v15 = vld [vmem:[%s0] sm:$0xf]
  %v16 = vld [vmem:[%s1] sm:$0xff]
  %v17 = vld [vmem:[%s1 + $0x8] sm:$0xff]
  %v18 = vld [vmem:[%s1 + $0x10] sm:$0xff]
  %v19 = vld [vmem:[%s1 + $0x18] sm:$0xff]
  %v20 = vld [vmem:[%s1 + $0x20] sm:$0xff]
  %v21 = vld [vmem:[%s1 + $0x28] sm:$0xff]
  %v22 = vld [vmem:[%s1 + $0x30] sm:$0xff]
  %v23 = vld [vmem:[%s1 + $0x38] sm:$0xff]
  %v24 = vld [vmem:[%s1 + $0x40] sm:$0xff]
  %v25 = vld [vmem:[%s1 + $0x48] sm:$0xff]
  %v26 = vld [vmem:[%s1 + $0x50] sm:$0xff]
  %v27 = vld [vmem:[%s1 + $0x58] sm:$0xff]
  %v28 = vld [vmem:[%s1 + $0x60] sm:$0xff]
  %v29 = vld [vmem:[%s1 + $0x68] sm:$0xff]
  %v30 = vld [vmem:[%s1 + $0x70] sm:$0xff]
  %v31 = vld [vmem:[%s1 + $0x78] sm:$0xff]
  %v32 = vld [vmem:[%s1 + $0x80] sm:$0xff]
  %v33 = vld [vmem:[%s1 + $0x88] sm:$0xff]
  %v34 = vld [vmem:[%s1 + $0x90] sm:$0xff]
  %v35 = vld [vmem:[%s1 + $0x98] sm:$0xff]
  %v36 = vld [vmem:[%s1 + $0xa0] sm:$0xff]
  %v37 = vld [vmem:[%s1 + $0xa8] sm:$0xff]
  %v38 = vld [vmem:[%s1 + $0xb0] sm:$0xff]
  %v39 = vld [vmem:[%s1 + $0xb8] sm:$0xff]
  %v40 = vld [vmem:[%s1 + $0xc0] sm:$0xff]
  %v41 = vld [vmem:[%s1 + $0xc8] sm:$0xff]
  %v42 = vld [vmem:[%s1 + $0xd0] sm:$0xff]
  %v43 = vld [vmem:[%s1 + $0xd8] sm:$0xff]
  %v44 = vld [vmem:[%s1 + $0xe0] sm:$0xff]
  %v45 = vld [vmem:[%s1 + $0xe8] sm:$0xff]
  %v46 = vld [vmem:[%s1 + $0xf0] sm:$0xff]
  %v47 = vld [vmem:[%s1 + $0xf8] sm:$0xff]
  %v48 = vld [vmem:[%s1 + $0x100] sm:$0xff]
  %v49 = vld [vmem:[%s1 + $0x108] sm:$0xff]
  %v50 = vld [vmem:[%s1 + $0x110] sm:$0xff]
  %v51 = vld [vmem:[%s1 + $0x118] sm:$0xff]
  %v52 = vld [vmem:[%s1 + $0x120] sm:$0xff]
  %v53 = vld [vmem:[%s1 + $0x128] sm:$0xff]
  %v54 = vld [vmem:[%s1 + $0x130] sm:$0xff]
  %v55 = vld [vmem:[%s1 + $0x138] sm:$0xff]
  %v56 = vld [vmem:[%s1 + $0x140] sm:$0xff]
  %v57 = vld [vmem:[%s1 + $0x148] sm:$0xff]
  %v58 = vld [vmem:[%s1 + $0x150] sm:$0xff]
  %v59 = vld [vmem:[%s1 + $0x158] sm:$0xff]
  %v60 = vld [vmem:[%s1 + $0x160] sm:$0xff]
  %v61 = vld [vmem:[%s1 + $0x168] sm:$0xff]
  %v62 = vld [vmem:[%s1 + $0x170] sm:$0xff]
  %v63 = vld [vmem:[%s1 + $0x178] sm:$0xff]
  %v64 = vld [vmem:[%s1 + $0x180] sm:$0xff]
  %v65 = vld [vmem:[%s1 + $0x188] sm:$0xff]
  %v66 = vld [vmem:[%s1 + $0x190] sm:$0xff]
  %v67 = vld [vmem:[%s1 + $0x198] sm:$0xff]
  %v68 = vld [vmem:[%s1 + $0x1a0] sm:$0xff]
  %v69 = vld [vmem:[%s1 + $0x1a8] sm:$0xff]
  %v70 = vld [vmem:[%s1 + $0x1b0] sm:$0xff]
  %v71 = vld [vmem:[%s1 + $0x1b8] sm:$0xff]
  %v72 = vld [vmem:[%s1 + $0x1c0] sm:$0xff]
  %v73 = vld [vmem:[%s1 + $0x1c8] sm:$0xff]
  %v74 = vld [vmem:[%s1 + $0x1d0] sm:$0xff]
  %v75 = vld [vmem:[%s1 + $0x1d8] sm:$0xff]
  %v76 = vld [vmem:[%s1 + $0x1e0] sm:$0xff]
  %v77 = vld [vmem:[%s1 + $0x1e8] sm:$0xff]
  %v78 = vld [vmem:[%s1 + $0x1f0] sm:$0xff]
  %v79 = vld [vmem:[%s1 + $0x1f8] sm:$0xff]
  %v80 = vld [vmem:[%s2] sm:$0xff]
  %82 = vset.pattern.permute.xlu0 0
  %83 = vperm.xlu0 %82, %v80
  %v84 = vpop.permute.xlu0 %83
  %v150 = vunpack.c.l.b16 %v16
  %v151 = vunpack.c.h.b16 %v16
  %v152 = vunpack.c.l.b16 %v17
  %v153 = vunpack.c.h.b16 %v17
  %v154 = vunpack.c.l.b16 %v18
  %v155 = vunpack.c.h.b16 %v18
  %v156 = vunpack.c.l.b16 %v19
  %v157 = vunpack.c.h.b16 %v19
  %v158 = vunpack.c.l.b16 %v20
  %v159 = vunpack.c.h.b16 %v20
  %v160 = vunpack.c.l.b16 %v21
  %v161 = vunpack.c.h.b16 %v21
  %v162 = vunpack.c.l.b16 %v22
  %v163 = vunpack.c.h.b16 %v22
  %v164 = vunpack.c.l.b16 %v23
  %v165 = vunpack.c.h.b16 %v23
  %v166 = vunpack.c.l.b16 %v24
  %v167 = vunpack.c.h.b16 %v24
  %v168 = vunpack.c.l.b16 %v25
  %v169 = vunpack.c.h.b16 %v25
  %v170 = vunpack.c.l.b16 %v26
  %v171 = vunpack.c.h.b16 %v26
  %v172 = vunpack.c.l.b16 %v27
  %v173 = vunpack.c.h.b16 %v27
  %v174 = vunpack.c.l.b16 %v28
  %v175 = vunpack.c.h.b16 %v28
  %v176 = vunpack.c.l.b16 %v29
  %v177 = vunpack.c.h.b16 %v29
  %v178 = vunpack.c.l.b16 %v30
  %v179 = vunpack.c.h.b16 %v30
  %v180 = vunpack.c.l.b16 %v31
  %v181 = vunpack.c.h.b16 %v31
  %v182 = vunpack.c.l.b16 %v32
  %v183 = vunpack.c.h.b16 %v32
  %v184 = vunpack.c.l.b16 %v33
  %v185 = vunpack.c.h.b16 %v33
  %v186 = vunpack.c.l.b16 %v34
  %v187 = vunpack.c.h.b16 %v34
  %v188 = vunpack.c.l.b16 %v35
  %v189 = vunpack.c.h.b16 %v35
  %v190 = vunpack.c.l.b16 %v36
  %v191 = vunpack.c.h.b16 %v36
  %v192 = vunpack.c.l.b16 %v37
  %v193 = vunpack.c.h.b16 %v37
  %v194 = vunpack.c.l.b16 %v38
  %v195 = vunpack.c.h.b16 %v38
  %v196 = vunpack.c.l.b16 %v39
  %v197 = vunpack.c.h.b16 %v39
  %v198 = vunpack.c.l.b16 %v40
  %v199 = vunpack.c.h.b16 %v40
  %v200 = vunpack.c.l.b16 %v41
  %v201 = vunpack.c.h.b16 %v41
  %v202 = vunpack.c.l.b16 %v42
  %v203 = vunpack.c.h.b16 %v42
  %v204 = vunpack.c.l.b16 %v43
  %v205 = vunpack.c.h.b16 %v43
  %v206 = vunpack.c.l.b16 %v44
  %v207 = vunpack.c.h.b16 %v44
  %v208 = vunpack.c.l.b16 %v45
  %v209 = vunpack.c.h.b16 %v45
  %v210 = vunpack.c.l.b16 %v46
  %v211 = vunpack.c.h.b16 %v46
  %v212 = vunpack.c.l.b16 %v47
  %v213 = vunpack.c.h.b16 %v47
  %v214 = vunpack.c.l.b16 %v48
  %v215 = vunpack.c.h.b16 %v48
  %v216 = vunpack.c.l.b16 %v49
  %v217 = vunpack.c.h.b16 %v49
  %v218 = vunpack.c.l.b16 %v50
  %v219 = vunpack.c.h.b16 %v50
  %v220 = vunpack.c.l.b16 %v51
  %v221 = vunpack.c.h.b16 %v51
  %v222 = vunpack.c.l.b16 %v52
  %v223 = vunpack.c.h.b16 %v52
  %v224 = vunpack.c.l.b16 %v53
  %v225 = vunpack.c.h.b16 %v53
  %v226 = vunpack.c.l.b16 %v54
  %v227 = vunpack.c.h.b16 %v54
  %v228 = vunpack.c.l.b16 %v55
  %v229 = vunpack.c.h.b16 %v55
  %v230 = vunpack.c.l.b16 %v56
  %v231 = vunpack.c.h.b16 %v56
  %v232 = vunpack.c.l.b16 %v57
  %v233 = vunpack.c.h.b16 %v57
  %v234 = vunpack.c.l.b16 %v58
  %v235 = vunpack.c.h.b16 %v58
  %v236 = vunpack.c.l.b16 %v59
  %v237 = vunpack.c.h.b16 %v59
  %v238 = vunpack.c.l.b16 %v60
  %v239 = vunpack.c.h.b16 %v60
  %v240 = vunpack.c.l.b16 %v61
  %v241 = vunpack.c.h.b16 %v61
  %v242 = vunpack.c.l.b16 %v62
  %v243 = vunpack.c.h.b16 %v62
  %v244 = vunpack.c.l.b16 %v63
  %v245 = vunpack.c.h.b16 %v63
  %v246 = vunpack.c.l.b16 %v64
  %v247 = vunpack.c.h.b16 %v64
  %v248 = vunpack.c.l.b16 %v65
  %v249 = vunpack.c.h.b16 %v65
  %v250 = vunpack.c.l.b16 %v66
  %v251 = vunpack.c.h.b16 %v66
  %v252 = vunpack.c.l.b16 %v67
  %v253 = vunpack.c.h.b16 %v67
  %v254 = vunpack.c.l.b16 %v68
  %v255 = vunpack.c.h.b16 %v68
  %v256 = vunpack.c.l.b16 %v69
  %v257 = vunpack.c.h.b16 %v69
  %v258 = vunpack.c.l.b16 %v70
  %v259 = vunpack.c.h.b16 %v70
  %v260 = vunpack.c.l.b16 %v71
  %v261 = vunpack.c.h.b16 %v71
  %v262 = vunpack.c.l.b16 %v72
  %v263 = vunpack.c.h.b16 %v72
  %v264 = vunpack.c.l.b16 %v73
  %v265 = vunpack.c.h.b16 %v73
  %v266 = vunpack.c.l.b16 %v74
  %v267 = vunpack.c.h.b16 %v74
  %v268 = vunpack.c.l.b16 %v75
  %v269 = vunpack.c.h.b16 %v75
  %v270 = vunpack.c.l.b16 %v76
  %v271 = vunpack.c.h.b16 %v76
  %v272 = vunpack.c.l.b16 %v77
  %v273 = vunpack.c.h.b16 %v77
  %v274 = vunpack.c.l.b16 %v78
  %v275 = vunpack.c.h.b16 %v78
  %v276 = vunpack.c.l.b16 %v79
  %v277 = vunpack.c.h.b16 %v79
  %v278 = vpack.c.b16 %v166, %v150
  %v279 = vpack.c.b16 %v167, %v151
  %v280 = vpack.c.b16 %v168, %v152
  %v281 = vpack.c.b16 %v169, %v153
  %v282 = vpack.c.b16 %v170, %v154
  %v283 = vpack.c.b16 %v171, %v155
  %v284 = vpack.c.b16 %v172, %v156
  %v285 = vpack.c.b16 %v173, %v157
  %v286 = vpack.c.b16 %v174, %v158
  %v287 = vpack.c.b16 %v175, %v159
  %v288 = vpack.c.b16 %v176, %v160
  %v289 = vpack.c.b16 %v177, %v161
  %v290 = vpack.c.b16 %v178, %v162
  %v291 = vpack.c.b16 %v179, %v163
  %v292 = vpack.c.b16 %v180, %v164
  %v293 = vpack.c.b16 %v181, %v165
  %v294 = vpack.c.b16 %v198, %v182
  %v295 = vpack.c.b16 %v199, %v183
  %v296 = vpack.c.b16 %v200, %v184
  %v297 = vpack.c.b16 %v201, %v185
  %v298 = vpack.c.b16 %v202, %v186
  %v299 = vpack.c.b16 %v203, %v187
  %v300 = vpack.c.b16 %v204, %v188
  %v301 = vpack.c.b16 %v205, %v189
  %v302 = vpack.c.b16 %v206, %v190
  %v303 = vpack.c.b16 %v207, %v191
  %v304 = vpack.c.b16 %v208, %v192
  %v305 = vpack.c.b16 %v209, %v193
  %v306 = vpack.c.b16 %v210, %v194
  %v307 = vpack.c.b16 %v211, %v195
  %v308 = vpack.c.b16 %v212, %v196
  %v309 = vpack.c.b16 %v213, %v197
  %v310 = vpack.c.b16 %v230, %v214
  %v311 = vpack.c.b16 %v231, %v215
  %v312 = vpack.c.b16 %v232, %v216
  %v313 = vpack.c.b16 %v233, %v217
  %v314 = vpack.c.b16 %v234, %v218
  %v315 = vpack.c.b16 %v235, %v219
  %v316 = vpack.c.b16 %v236, %v220
  %v317 = vpack.c.b16 %v237, %v221
  %v318 = vpack.c.b16 %v238, %v222
  %v319 = vpack.c.b16 %v239, %v223
  %v320 = vpack.c.b16 %v240, %v224
  %v321 = vpack.c.b16 %v241, %v225
  %v322 = vpack.c.b16 %v242, %v226
  %v323 = vpack.c.b16 %v243, %v227
  %v324 = vpack.c.b16 %v244, %v228
  %v325 = vpack.c.b16 %v245, %v229
  %v326 = vpack.c.b16 %v262, %v246
  %v327 = vpack.c.b16 %v263, %v247
  %v328 = vpack.c.b16 %v264, %v248
  %v329 = vpack.c.b16 %v265, %v249
  %v330 = vpack.c.b16 %v266, %v250
  %v331 = vpack.c.b16 %v267, %v251
  %v332 = vpack.c.b16 %v268, %v252
  %v333 = vpack.c.b16 %v269, %v253
  %v334 = vpack.c.b16 %v270, %v254
  %v335 = vpack.c.b16 %v271, %v255
  %v336 = vpack.c.b16 %v272, %v256
  %v337 = vpack.c.b16 %v273, %v257
  %v338 = vpack.c.b16 %v274, %v258
  %v339 = vpack.c.b16 %v275, %v259
  %v340 = vpack.c.b16 %v276, %v260
  %v341 = vpack.c.b16 %v277, %v261
  %vm406 = vcmask 523264
  %v408 = vsel %vm406, %v15, 0
  %410 = vmatprep.subr.bf16.mxu0 %v279
  %411 = vmatpush1.bf16.msra.mxu0 %v278
  %412 = vmatprep.subr.bf16.mxu0 %v295
  %413 = vmatpush1.bf16.msra.mxu0 %v294
  %414 = vmatprep.subr.bf16.mxu0 %v311
  %415 = vmatpush1.bf16.msra.mxu0 %v310
  %416 = vmatprep.subr.bf16.mxu0 %v327
  %417 = vmatpush1.bf16.msra.mxu0 %v326
  %418 = vmatprep.subr.bf16.mxu0 0
  %419 = vmatpush1.bf16.msra.mxu0 0
  %420 = vmatprep.subr.bf16.mxu0 0
  %421 = vmatpush1.bf16.msra.mxu0 0
  %422 = vmatprep.subr.bf16.mxu0 0
  %423 = vmatpush1.bf16.msra.mxu0 0
  %424 = vmatprep.subr.bf16.mxu0 0
  %425 = vmatpush1.bf16.msra.mxu0 0
  %426 = vmatprep.subr.bf16.mxu0 0
  %427 = vmatpush1.bf16.msra.mxu0 0
  %428 = vmatprep.subr.bf16.mxu0 0
  %429 = vmatpush1.bf16.msra.mxu0 0
  %430 = vmatprep.subr.bf16.mxu0 0
  %431 = vmatpush1.bf16.msra.mxu0 0
  %432 = vmatprep.subr.bf16.mxu0 0
  %433 = vmatpush1.bf16.msra.mxu0 0
  %434 = vmatprep.subr.bf16.mxu0 0
  %435 = vmatpush1.bf16.msra.mxu0 0
  %436 = vmatprep.subr.bf16.mxu0 0
  %437 = vmatpush1.bf16.msra.mxu0 0
  %438 = vmatprep.subr.bf16.mxu0 0
  %439 = vmatpush1.bf16.msra.mxu0 0
  %440 = vmatprep.subr.bf16.mxu0 0
  %441 = vmatpush1.bf16.msra.mxu0 0
  %442 = vmatprep.mubr.bf16.mxu0 0
  %443 = vmatmul.mubr.bf16.gmra.mrb[0].mxu0 %v408
  %v444 = vpop.f32.mrb[0].mxu0
  %v445 = vadd.f32 %v84, %v444
  %v446 = vpop.f32.mrb[0].mxu0
  %v447 = vadd.f32 %v84, %v446
  %v448 = vpop.f32.mrb[0].mxu0
  %v449 = vpop.f32.mrb[0].mxu0
  %450 = vdwg.mxu0
  %451 = vmatprep.subr.bf16.mxu0 %v281
  %452 = vmatpush1.bf16.msra.mxu0 %v280
  %453 = vmatprep.subr.bf16.mxu0 %v297
  %454 = vmatpush1.bf16.msra.mxu0 %v296
  %455 = vmatprep.subr.bf16.mxu0 %v313
  %456 = vmatpush1.bf16.msra.mxu0 %v312
  %457 = vmatprep.subr.bf16.mxu0 %v329
  %458 = vmatpush1.bf16.msra.mxu0 %v328
  %459 = vmatprep.subr.bf16.mxu0 0
  %460 = vmatpush1.bf16.msra.mxu0 0
  %461 = vmatprep.subr.bf16.mxu0 0
  %462 = vmatpush1.bf16.msra.mxu0 0
  %463 = vmatprep.subr.bf16.mxu0 0
  %464 = vmatpush1.bf16.msra.mxu0 0
  %465 = vmatprep.subr.bf16.mxu0 0
  %466 = vmatpush1.bf16.msra.mxu0 0
  %467 = vmatprep.subr.bf16.mxu0 0
  %468 = vmatpush1.bf16.msra.mxu0 0
  %469 = vmatprep.subr.bf16.mxu0 0
  %470 = vmatpush1.bf16.msra.mxu0 0
  %471 = vmatprep.subr.bf16.mxu0 0
  %472 = vmatpush1.bf16.msra.mxu0 0
  %473 = vmatprep.subr.bf16.mxu0 0
  %474 = vmatpush1.bf16.msra.mxu0 0
  %475 = vmatprep.subr.bf16.mxu0 0
  %476 = vmatpush1.bf16.msra.mxu0 0
  %477 = vmatprep.subr.bf16.mxu0 0
  %478 = vmatpush1.bf16.msra.mxu0 0
  %479 = vmatprep.subr.bf16.mxu0 0
  %480 = vmatpush1.bf16.msra.mxu0 0
  %481 = vmatprep.subr.bf16.mxu0 0
  %482 = vmatpush1.bf16.msra.mxu0 0
  %483 = vmatprep.mubr.bf16.mxu0 0
  %484 = vmatmul.mubr.bf16.gmra.mrb[0].mxu0 %v408
  %v485 = vpop.f32.mrb[0].mxu0
  %v486 = vadd.f32 %v84, %v485
  %v487 = vpop.f32.mrb[0].mxu0
  %v488 = vadd.f32 %v84, %v487
  %v489 = vpop.f32.mrb[0].mxu0
  %v490 = vpop.f32.mrb[0].mxu0
  %491 = vdwg.mxu0
  %492 = vmatprep.subr.bf16.mxu0 %v283
  %493 = vmatpush1.bf16.msra.mxu0 %v282
  %494 = vmatprep.subr.bf16.mxu0 %v299
  %495 = vmatpush1.bf16.msra.mxu0 %v298
  %496 = vmatprep.subr.bf16.mxu0 %v315
  %497 = vmatpush1.bf16.msra.mxu0 %v314
  %498 = vmatprep.subr.bf16.mxu0 %v331
  %499 = vmatpush1.bf16.msra.mxu0 %v330
  %500 = vmatprep.subr.bf16.mxu0 0
  %501 = vmatpush1.bf16.msra.mxu0 0
  %502 = vmatprep.subr.bf16.mxu0 0
  %503 = vmatpush1.bf16.msra.mxu0 0
  %504 = vmatprep.subr.bf16.mxu0 0
  %505 = vmatpush1.bf16.msra.mxu0 0
  %506 = vmatprep.subr.bf16.mxu0 0
  %507 = vmatpush1.bf16.msra.mxu0 0
  %508 = vmatprep.subr.bf16.mxu0 0
  %509 = vmatpush1.bf16.msra.mxu0 0
  %510 = vmatprep.subr.bf16.mxu0 0
  %511 = vmatpush1.bf16.msra.mxu0 0
  %512 = vmatprep.subr.bf16.mxu0 0
  %513 = vmatpush1.bf16.msra.mxu0 0
  %514 = vmatprep.subr.bf16.mxu0 0
  %515 = vmatpush1.bf16.msra.mxu0 0
  %516 = vmatprep.subr.bf16.mxu0 0
  %517 = vmatpush1.bf16.msra.mxu0 0
  %518 = vmatprep.subr.bf16.mxu0 0
  %519 = vmatpush1.bf16.msra.mxu0 0
  %520 = vmatprep.subr.bf16.mxu0 0
  %521 = vmatpush1.bf16.msra.mxu0 0
  %522 = vmatprep.subr.bf16.mxu0 0
  %523 = vmatpush1.bf16.msra.mxu0 0
  %524 = vmatprep.mubr.bf16.mxu0 0
  %525 = vmatmul.mubr.bf16.gmra.mrb[0].mxu0 %v408
  %v526 = vpop.f32.mrb[0].mxu0
  %v527 = vadd.f32 %v84, %v526
  %v528 = vpop.f32.mrb[0].mxu0
  %v529 = vadd.f32 %v84, %v528
  %v530 = vpop.f32.mrb[0].mxu0
  %v531 = vpop.f32.mrb[0].mxu0
  %532 = vdwg.mxu0
  %533 = vmatprep.subr.bf16.mxu0 %v285
  %534 = vmatpush1.bf16.msra.mxu0 %v284
  %535 = vmatprep.subr.bf16.mxu0 %v301
  %536 = vmatpush1.bf16.msra.mxu0 %v300
  %537 = vmatprep.subr.bf16.mxu0 %v317
  %538 = vmatpush1.bf16.msra.mxu0 %v316
  %539 = vmatprep.subr.bf16.mxu0 %v333
  %540 = vmatpush1.bf16.msra.mxu0 %v332
  %541 = vmatprep.subr.bf16.mxu0 0
  %542 = vmatpush1.bf16.msra.mxu0 0
  %543 = vmatprep.subr.bf16.mxu0 0
  %544 = vmatpush1.bf16.msra.mxu0 0
  %545 = vmatprep.subr.bf16.mxu0 0
  %546 = vmatpush1.bf16.msra.mxu0 0
  %547 = vmatprep.subr.bf16.mxu0 0
  %548 = vmatpush1.bf16.msra.mxu0 0
  %549 = vmatprep.subr.bf16.mxu0 0
  %550 = vmatpush1.bf16.msra.mxu0 0
  %551 = vmatprep.subr.bf16.mxu0 0
  %552 = vmatpush1.bf16.msra.mxu0 0
  %553 = vmatprep.subr.bf16.mxu0 0
  %554 = vmatpush1.bf16.msra.mxu0 0
  %555 = vmatprep.subr.bf16.mxu0 0
  %556 = vmatpush1.bf16.msra.mxu0 0
  %557 = vmatprep.subr.bf16.mxu0 0
  %558 = vmatpush1.bf16.msra.mxu0 0
  %559 = vmatprep.subr.bf16.mxu0 0
  %560 = vmatpush1.bf16.msra.mxu0 0
  %561 = vmatprep.subr.bf16.mxu0 0
  %562 = vmatpush1.bf16.msra.mxu0 0
  %563 = vmatprep.subr.bf16.mxu0 0
  %564 = vmatpush1.bf16.msra.mxu0 0
  %565 = vmatprep.mubr.bf16.mxu0 0
  %566 = vmatmul.mubr.bf16.gmra.mrb[0].mxu0 %v408
  %v567 = vpop.f32.mrb[0].mxu0
  %v568 = vadd.f32 %v84, %v567
  %v569 = vpop.f32.mrb[0].mxu0
  %v570 = vadd.f32 %v84, %v569
  %v571 = vpop.f32.mrb[0].mxu0
  %v572 = vpop.f32.mrb[0].mxu0
  %573 = vdwg.mxu0
  %574 = vmatprep.subr.bf16.mxu0 %v287
  %575 = vmatpush1.bf16.msra.mxu0 %v286
  %576 = vmatprep.subr.bf16.mxu0 %v303
  %577 = vmatpush1.bf16.msra.mxu0 %v302
  %578 = vmatprep.subr.bf16.mxu0 %v319
  %579 = vmatpush1.bf16.msra.mxu0 %v318
  %580 = vmatprep.subr.bf16.mxu0 %v335
  %581 = vmatpush1.bf16.msra.mxu0 %v334
  %582 = vmatprep.subr.bf16.mxu0 0
  %583 = vmatpush1.bf16.msra.mxu0 0
  %584 = vmatprep.subr.bf16.mxu0 0
  %585 = vmatpush1.bf16.msra.mxu0 0
  %586 = vmatprep.subr.bf16.mxu0 0
  %587 = vmatpush1.bf16.msra.mxu0 0
  %588 = vmatprep.subr.bf16.mxu0 0
  %589 = vmatpush1.bf16.msra.mxu0 0
  %590 = vmatprep.subr.bf16.mxu0 0
  %591 = vmatpush1.bf16.msra.mxu0 0
  %592 = vmatprep.subr.bf16.mxu0 0
  %593 = vmatpush1.bf16.msra.mxu0 0
  %594 = vmatprep.subr.bf16.mxu0 0
  %595 = vmatpush1.bf16.msra.mxu0 0
  %596 = vmatprep.subr.bf16.mxu0 0
  %597 = vmatpush1.bf16.msra.mxu0 0
  %598 = vmatprep.subr.bf16.mxu0 0
  %599 = vmatpush1.bf16.msra.mxu0 0
  %600 = vmatprep.subr.bf16.mxu0 0
  %601 = vmatpush1.bf16.msra.mxu0 0
  %602 = vmatprep.subr.bf16.mxu0 0
  %603 = vmatpush1.bf16.msra.mxu0 0
  %604 = vmatprep.subr.bf16.mxu0 0
  %605 = vmatpush1.bf16.msra.mxu0 0
  %606 = vmatprep.mubr.bf16.mxu0 0
  %607 = vmatmul.mubr.bf16.gmra.mrb[0].mxu0 %v408
  %v608 = vpop.f32.mrb[0].mxu0
  %v609 = vadd.f32 %v84, %v608
  %v610 = vpop.f32.mrb[0].mxu0
  %v611 = vadd.f32 %v84, %v610
  %v612 = vpop.f32.mrb[0].mxu0
  %v613 = vpop.f32.mrb[0].mxu0
  %614 = vdwg.mxu0
  %615 = vmatprep.subr.bf16.mxu0 %v289
  %616 = vmatpush1.bf16.msra.mxu0 %v288
  %617 = vmatprep.subr.bf16.mxu0 %v305
  %618 = vmatpush1.bf16.msra.mxu0 %v304
  %619 = vmatprep.subr.bf16.mxu0 %v321
  %620 = vmatpush1.bf16.msra.mxu0 %v320
  %621 = vmatprep.subr.bf16.mxu0 %v337
  %622 = vmatpush1.bf16.msra.mxu0 %v336
  %623 = vmatprep.subr.bf16.mxu0 0
  %624 = vmatpush1.bf16.msra.mxu0 0
  %625 = vmatprep.subr.bf16.mxu0 0
  %626 = vmatpush1.bf16.msra.mxu0 0
  %627 = vmatprep.subr.bf16.mxu0 0
  %628 = vmatpush1.bf16.msra.mxu0 0
  %629 = vmatprep.subr.bf16.mxu0 0
  %630 = vmatpush1.bf16.msra.mxu0 0
  %631 = vmatprep.subr.bf16.mxu0 0
  %632 = vmatpush1.bf16.msra.mxu0 0
  %633 = vmatprep.subr.bf16.mxu0 0
  %634 = vmatpush1.bf16.msra.mxu0 0
  %635 = vmatprep.subr.bf16.mxu0 0
  %636 = vmatpush1.bf16.msra.mxu0 0
  %637 = vmatprep.subr.bf16.mxu0 0
  %638 = vmatpush1.bf16.msra.mxu0 0
  %639 = vmatprep.subr.bf16.mxu0 0
  %640 = vmatpush1.bf16.msra.mxu0 0
  %641 = vmatprep.subr.bf16.mxu0 0
  %642 = vmatpush1.bf16.msra.mxu0 0
  %643 = vmatprep.subr.bf16.mxu0 0
  %644 = vmatpush1.bf16.msra.mxu0 0
  %645 = vmatprep.subr.bf16.mxu0 0
  %646 = vmatpush1.bf16.msra.mxu0 0
  %647 = vmatprep.mubr.bf16.mxu0 0
  %648 = vmatmul.mubr.bf16.gmra.mrb[0].mxu0 %v408
  %v649 = vpop.f32.mrb[0].mxu0
  %v650 = vadd.f32 %v84, %v649
  %v651 = vpop.f32.mrb[0].mxu0
  %v652 = vadd.f32 %v84, %v651
  %v653 = vpop.f32.mrb[0].mxu0
  %v654 = vpop.f32.mrb[0].mxu0
  %655 = vdwg.mxu0
  %656 = vmatprep.subr.bf16.mxu0 %v291
  %657 = vmatpush1.bf16.msra.mxu0 %v290
  %658 = vmatprep.subr.bf16.mxu0 %v307
  %659 = vmatpush1.bf16.msra.mxu0 %v306
  %660 = vmatprep.subr.bf16.mxu0 %v323
  %661 = vmatpush1.bf16.msra.mxu0 %v322
  %662 = vmatprep.subr.bf16.mxu0 %v339
  %663 = vmatpush1.bf16.msra.mxu0 %v338
  %664 = vmatprep.subr.bf16.mxu0 0
  %665 = vmatpush1.bf16.msra.mxu0 0
  %666 = vmatprep.subr.bf16.mxu0 0
  %667 = vmatpush1.bf16.msra.mxu0 0
  %668 = vmatprep.subr.bf16.mxu0 0
  %669 = vmatpush1.bf16.msra.mxu0 0
  %670 = vmatprep.subr.bf16.mxu0 0
  %671 = vmatpush1.bf16.msra.mxu0 0
  %672 = vmatprep.subr.bf16.mxu0 0
  %673 = vmatpush1.bf16.msra.mxu0 0
  %674 = vmatprep.subr.bf16.mxu0 0
  %675 = vmatpush1.bf16.msra.mxu0 0
  %676 = vmatprep.subr.bf16.mxu0 0
  %677 = vmatpush1.bf16.msra.mxu0 0
  %678 = vmatprep.subr.bf16.mxu0 0
  %679 = vmatpush1.bf16.msra.mxu0 0
  %680 = vmatprep.subr.bf16.mxu0 0
  %681 = vmatpush1.bf16.msra.mxu0 0
  %682 = vmatprep.subr.bf16.mxu0 0
  %683 = vmatpush1.bf16.msra.mxu0 0
  %684 = vmatprep.subr.bf16.mxu0 0
  %685 = vmatpush1.bf16.msra.mxu0 0
  %686 = vmatprep.subr.bf16.mxu0 0
  %687 = vmatpush1.bf16.msra.mxu0 0
  %688 = vmatprep.mubr.bf16.mxu0 0
  %689 = vmatmul.mubr.bf16.gmra.mrb[0].mxu0 %v408
  %v690 = vpop.f32.mrb[0].mxu0
  %v691 = vadd.f32 %v84, %v690
  %v692 = vpop.f32.mrb[0].mxu0
  %v693 = vadd.f32 %v84, %v692
  %v694 = vpop.f32.mrb[0].mxu0
  %v695 = vpop.f32.mrb[0].mxu0
  %696 = vdwg.mxu0
  %697 = vmatprep.subr.bf16.mxu0 %v293
  %698 = vmatpush1.bf16.msra.mxu0 %v292
  %699 = vmatprep.subr.bf16.mxu0 %v309
  %700 = vmatpush1.bf16.msra.mxu0 %v308
  %701 = vmatprep.subr.bf16.mxu0 %v325
  %702 = vmatpush1.bf16.msra.mxu0 %v324
  %703 = vmatprep.subr.bf16.mxu0 %v341
  %704 = vmatpush1.bf16.msra.mxu0 %v340
  %705 = vmatprep.subr.bf16.mxu0 0
  %706 = vmatpush1.bf16.msra.mxu0 0
  %707 = vmatprep.subr.bf16.mxu0 0
  %708 = vmatpush1.bf16.msra.mxu0 0
  %709 = vmatprep.subr.bf16.mxu0 0
  %710 = vmatpush1.bf16.msra.mxu0 0
  %711 = vmatprep.subr.bf16.mxu0 0
  %712 = vmatpush1.bf16.msra.mxu0 0
  %713 = vmatprep.subr.bf16.mxu0 0
  %714 = vmatpush1.bf16.msra.mxu0 0
  %715 = vmatprep.subr.bf16.mxu0 0
  %716 = vmatpush1.bf16.msra.mxu0 0
  %717 = vmatprep.subr.bf16.mxu0 0
  %718 = vmatpush1.bf16.msra.mxu0 0
  %719 = vmatprep.subr.bf16.mxu0 0
  %720 = vmatpush1.bf16.msra.mxu0 0
  %721 = vmatprep.subr.bf16.mxu0 0
  %722 = vmatpush1.bf16.msra.mxu0 0
  %723 = vmatprep.subr.bf16.mxu0 0
  %724 = vmatpush1.bf16.msra.mxu0 0
  %725 = vmatprep.subr.bf16.mxu0 0
  %726 = vmatpush1.bf16.msra.mxu0 0
  %727 = vmatprep.subr.bf16.mxu0 0
  %728 = vmatpush1.bf16.msra.mxu0 0
  %729 = vmatprep.mubr.bf16.mxu0 0
  %730 = vmatmul.mubr.bf16.gmra.mrb[0].mxu0 %v408
  %v731 = vpop.f32.mrb[0].mxu0
  %v732 = vadd.f32 %v84, %v731
  %v733 = vpop.f32.mrb[0].mxu0
  %v734 = vadd.f32 %v84, %v733
  %v735 = vpop.f32.mrb[0].mxu0
  %v736 = vpop.f32.mrb[0].mxu0
  %737 = vdwg.mxu0
  %vm738 = vcmp.ge.f32.partialorder %v445, 0.0
  %vm739 = vcmp.ge.f32.partialorder %v447, 0.0
  %vm740 = vcmp.ge.f32.partialorder %v486, 0.0
  %vm741 = vcmp.ge.f32.partialorder %v488, 0.0
  %vm742 = vcmp.ge.f32.partialorder %v527, 0.0
  %vm743 = vcmp.ge.f32.partialorder %v529, 0.0
  %vm744 = vcmp.ge.f32.partialorder %v568, 0.0
  %vm745 = vcmp.ge.f32.partialorder %v570, 0.0
  %vm746 = vcmp.ge.f32.partialorder %v609, 0.0
  %vm747 = vcmp.ge.f32.partialorder %v611, 0.0
  %vm748 = vcmp.ge.f32.partialorder %v650, 0.0
  %vm749 = vcmp.ge.f32.partialorder %v652, 0.0
  %vm750 = vcmp.ge.f32.partialorder %v691, 0.0
  %vm751 = vcmp.ge.f32.partialorder %v693, 0.0
  %vm752 = vcmp.ge.f32.partialorder %v732, 0.0
  %vm753 = vcmp.ge.f32.partialorder %v734, 0.0
  %v754 = vmul.f32 %v445, 0.2
  %v755 = vmul.f32 %v447, 0.2
  %v756 = vmul.f32 %v486, 0.2
  %v757 = vmul.f32 %v488, 0.2
  %v758 = vmul.f32 %v527, 0.2
  %v759 = vmul.f32 %v529, 0.2
  %v760 = vmul.f32 %v568, 0.2
  %v761 = vmul.f32 %v570, 0.2
  %v762 = vmul.f32 %v609, 0.2
  %v763 = vmul.f32 %v611, 0.2
  %v764 = vmul.f32 %v650, 0.2
  %v765 = vmul.f32 %v652, 0.2
  %v766 = vmul.f32 %v691, 0.2
  %v767 = vmul.f32 %v693, 0.2
  %v768 = vmul.f32 %v732, 0.2
  %v769 = vmul.f32 %v734, 0.2
  %v770 = vsel %vm738, %v445, %v754
  %v771 = vsel %vm739, %v447, %v755
  %v772 = vsel %vm740, %v486, %v756
  %v773 = vsel %vm741, %v488, %v757
  %v774 = vsel %vm742, %v527, %v758
  %v775 = vsel %vm743, %v529, %v759
  %v776 = vsel %vm744, %v568, %v760
  %v777 = vsel %vm745, %v570, %v761
  %v778 = vsel %vm746, %v609, %v762
  %v779 = vsel %vm747, %v611, %v763
  %v780 = vsel %vm748, %v650, %v764
  %v781 = vsel %vm749, %v652, %v765
  %v782 = vsel %vm750, %v691, %v766
  %v783 = vsel %vm751, %v693, %v767
  %v784 = vsel %vm752, %v732, %v768
  %v785 = vsel %vm753, %v734, %v769
  %786 = vst [vmem:[%s3] sm:$0xff] %v770
  %787 = vst [vmem:[%s3 + $0x8] sm:$0xff] %v771
  %788 = vst [vmem:[%s3 + $0x10] sm:$0xff] %v772
  %789 = vst [vmem:[%s3 + $0x18] sm:$0xff] %v773
  %790 = vst [vmem:[%s3 + $0x20] sm:$0xff] %v774
  %791 = vst [vmem:[%s3 + $0x28] sm:$0xff] %v775
  %792 = vst [vmem:[%s3 + $0x30] sm:$0xff] %v776
  %793 = vst [vmem:[%s3 + $0x38] sm:$0xff] %v777
  %794 = vst [vmem:[%s3 + $0x40] sm:$0xff] %v778
  %795 = vst [vmem:[%s3 + $0x48] sm:$0xff] %v779
  %796 = vst [vmem:[%s3 + $0x50] sm:$0xff] %v780
  %797 = vst [vmem:[%s3 + $0x58] sm:$0xff] %v781
  %798 = vst [vmem:[%s3 + $0x60] sm:$0xff] %v782
  %799 = vst [vmem:[%s3 + $0x68] sm:$0xff] %v783
  %800 = vst [vmem:[%s3 + $0x70] sm:$0xff] %v784
  %801 = vst [vmem:[%s3 + $0x78] sm:$0xff] %v785
  // Predicated region
  $region14: #{_lambda_.3} parent=0 // pred_check
    _
  $region15: #{_lambda_.3} parent=0 // pred_check_branch
    %803 = sbr.rel (0) target = $region17
  $region16: #{_lambda_.3} parent=0 // pred_region
    _
  $region17: #{_lambda_.3} parent=0 // pred_fallthru
    _
  // Predicated region
  $region18: #{_lambda_.3} parent=0 // pred_check
    _
  $region19: #{_lambda_.3} parent=0 // pred_check_branch
    %805 = sbr.rel (0) target = $region21
  $region20: #{_lambda_.3} parent=0 // pred_region
    _
  $region21: #{_lambda_.3} parent=0 // pred_fallthru
    _

// kernel: _lambda_.4
$region0: #{_lambda_.4}
  #allocation0 [shape = 'u32[]', space=smem, size = 0x4, offset = 0x4, fixed_abs, tag = 'smem constant byte address 0x4 - core index']
  #allocation1 [shape = 'u32[144,128]{1,0:T(1,128)}', space=vmem, size = 0x12000, scoped, tag = 'internal scratch']
  %s0 = inlined_call_operand.vmem [shape: bf16[16,128], index: 0, kind: input, shape index: {}]
  %s1 = inlined_call_operand.vmem [shape: bf16[128,512], index: 1, kind: input, shape index: {}]
  %s2 = inlined_call_operand.vmem [shape: f32[16,1], index: 2, kind: input, shape index: {}]
  %s3 = inlined_call_operand.vmem [shape: f32[16,512], index: 3, kind: output, shape index: {}]
  %s4 = sld [smem:[#allocation0]]
  $region22: #{_lambda_.4} parent=0
    _
  %s6 = ssub.s32 1, %s4
  %s7 = scalar_select 0, %s6, %s4
  // Predicated region
  $region2: #{_lambda_.4} parent=0 // pred_check
    _
  $region3: #{_lambda_.4} parent=0 // pred_check_branch
    %9 = sbr.rel (0) target = $region5
  $region4: #{_lambda_.4} parent=0 // pred_region
    _
  $region5: #{_lambda_.4} parent=0 // pred_fallthru
    _
  // Predicated region
  $region6: #{_lambda_.4} parent=0 // pred_check
    _
  $region7: #{_lambda_.4} parent=0 // pred_check_branch
    %11 = sbr.rel (0) target = $region9
  $region8: #{_lambda_.4} parent=0 // pred_region
    _
  $region9: #{_lambda_.4} parent=0 // pred_fallthru
    _
  // Predicated region
  $region10: #{_lambda_.4} parent=0 // pred_check
    _
  $region11: #{_lambda_.4} parent=0 // pred_check_branch
    %13 = sbr.rel (0) target = $region13
  $region12: #{_lambda_.4} parent=0 // pred_region
    _
  $region13: #{_lambda_.4} parent=0 // pred_fallthru
    _
  %v15 = vld [vmem:[%s0] sm:$0xf]
  %v16 = vld [vmem:[%s0 + $0x4] sm:$0xf]
  %v17 = vld [vmem:[%s1] sm:$0xff]
  %v18 = vld [vmem:[%s1 + $0x8] sm:$0xff]
  %v19 = vld [vmem:[%s1 + $0x10] sm:$0xff]
  %v20 = vld [vmem:[%s1 + $0x18] sm:$0xff]
  %v21 = vld [vmem:[%s1 + $0x20] sm:$0xff]
  %v22 = vld [vmem:[%s1 + $0x28] sm:$0xff]
  %v23 = vld [vmem:[%s1 + $0x30] sm:$0xff]
  %v24 = vld [vmem:[%s1 + $0x38] sm:$0xff]
  %v25 = vld [vmem:[%s1 + $0x40] sm:$0xff]
  %v26 = vld [vmem:[%s1 + $0x48] sm:$0xff]
  %v27 = vld [vmem:[%s1 + $0x50] sm:$0xff]
  %v28 = vld [vmem:[%s1 + $0x58] sm:$0xff]
  %v29 = vld [vmem:[%s1 + $0x60] sm:$0xff]
  %v30 = vld [vmem:[%s1 + $0x68] sm:$0xff]
  %v31 = vld [vmem:[%s1 + $0x70] sm:$0xff]
  %v32 = vld [vmem:[%s1 + $0x78] sm:$0xff]
  %v33 = vld [vmem:[%s1 + $0x80] sm:$0xff]
  %v34 = vld [vmem:[%s1 + $0x88] sm:$0xff]
  %v35 = vld [vmem:[%s1 + $0x90] sm:$0xff]
  %v36 = vld [vmem:[%s1 + $0x98] sm:$0xff]
  %v37 = vld [vmem:[%s1 + $0xa0] sm:$0xff]
  %v38 = vld [vmem:[%s1 + $0xa8] sm:$0xff]
  %v39 = vld [vmem:[%s1 + $0xb0] sm:$0xff]
  %v40 = vld [vmem:[%s1 + $0xb8] sm:$0xff]
  %v41 = vld [vmem:[%s1 + $0xc0] sm:$0xff]
  %v42 = vld [vmem:[%s1 + $0xc8] sm:$0xff]
  %v43 = vld [vmem:[%s1 + $0xd0] sm:$0xff]
  %v44 = vld [vmem:[%s1 + $0xd8] sm:$0xff]
  %v45 = vld [vmem:[%s1 + $0xe0] sm:$0xff]
  %v46 = vld [vmem:[%s1 + $0xe8] sm:$0xff]
  %v47 = vld [vmem:[%s1 + $0xf0] sm:$0xff]
  %v48 = vld [vmem:[%s1 + $0xf8] sm:$0xff]
  %v49 = vld [vmem:[%s2] sm:$0xff]
  %v50 = vld [vmem:[%s2 + $0x8] sm:$0xff]
  %52 = vset.pattern.permute.xlu0 0
  %53 = vperm.xlu0 %52, %v49
  %v54 = vpop.permute.xlu0 %53
  %57 = vset.pattern.permute.xlu0 0
  %58 = vperm.xlu0 %57, %v50
  %v59 = vpop.permute.xlu0 %58
  %v63 = vunpack.c.l.b16 %v15
  %v64 = vunpack.c.l.b16 %v16
  %v65 = vpack.c.b16 %v64, %v63
  %v99 = vunpack.c.l.b16 %v17
  %v100 = vunpack.c.h.b16 %v17
  %v101 = vunpack.c.l.b16 %v18
  %v102 = vunpack.c.h.b16 %v18
  %v103 = vunpack.c.l.b16 %v19
  %v104 = vunpack.c.h.b16 %v19
  %v105 = vunpack.c.l.b16 %v20
  %v106 = vunpack.c.h.b16 %v20
  %v107 = vunpack.c.l.b16 %v21
  %v108 = vunpack.c.h.b16 %v21
  %v109 = vunpack.c.l.b16 %v22
  %v110 = vunpack.c.h.b16 %v22
  %v111 = vunpack.c.l.b16 %v23
  %v112 = vunpack.c.h.b16 %v23
  %v113 = vunpack.c.l.b16 %v24
  %v114 = vunpack.c.h.b16 %v24
  %v115 = vunpack.c.l.b16 %v25
  %v116 = vunpack.c.h.b16 %v25
  %v117 = vunpack.c.l.b16 %v26
  %v118 = vunpack.c.h.b16 %v26
  %v119 = vunpack.c.l.b16 %v27
  %v120 = vunpack.c.h.b16 %v27
  %v121 = vunpack.c.l.b16 %v28
  %v122 = vunpack.c.h.b16 %v28
  %v123 = vunpack.c.l.b16 %v29
  %v124 = vunpack.c.h.b16 %v29
  %v125 = vunpack.c.l.b16 %v30
  %v126 = vunpack.c.h.b16 %v30
  %v127 = vunpack.c.l.b16 %v31
  %v128 = vunpack.c.h.b16 %v31
  %v129 = vunpack.c.l.b16 %v32
  %v130 = vunpack.c.h.b16 %v32
  %v131 = vunpack.c.l.b16 %v33
  %v132 = vunpack.c.h.b16 %v33
  %v133 = vunpack.c.l.b16 %v34
  %v134 = vunpack.c.h.b16 %v34
  %v135 = vunpack.c.l.b16 %v35
  %v136 = vunpack.c.h.b16 %v35
  %v137 = vunpack.c.l.b16 %v36
  %v138 = vunpack.c.h.b16 %v36
  %v139 = vunpack.c.l.b16 %v37
  %v140 = vunpack.c.h.b16 %v37
  %v141 = vunpack.c.l.b16 %v38
  %v142 = vunpack.c.h.b16 %v38
  %v143 = vunpack.c.l.b16 %v39
  %v144 = vunpack.c.h.b16 %v39
  %v145 = vunpack.c.l.b16 %v40
  %v146 = vunpack.c.h.b16 %v40
  %v147 = vunpack.c.l.b16 %v41
  %v148 = vunpack.c.h.b16 %v41
  %v149 = vunpack.c.l.b16 %v42
  %v150 = vunpack.c.h.b16 %v42
  %v151 = vunpack.c.l.b16 %v43
  %v152 = vunpack.c.h.b16 %v43
  %v153 = vunpack.c.l.b16 %v44
  %v154 = vunpack.c.h.b16 %v44
  %v155 = vunpack.c.l.b16 %v45
  %v156 = vunpack.c.h.b16 %v45
  %v157 = vunpack.c.l.b16 %v46
  %v158 = vunpack.c.h.b16 %v46
  %v159 = vunpack.c.l.b16 %v47
  %v160 = vunpack.c.h.b16 %v47
  %v161 = vunpack.c.l.b16 %v48
  %v162 = vunpack.c.h.b16 %v48
  %v163 = vpack.c.b16 %v103, %v99
  %v164 = vpack.c.b16 %v104, %v100
  %v165 = vpack.c.b16 %v105, %v101
  %v166 = vpack.c.b16 %v106, %v102
  %v167 = vpack.c.b16 %v111, %v107
  %v168 = vpack.c.b16 %v112, %v108
  %v169 = vpack.c.b16 %v113, %v109
  %v170 = vpack.c.b16 %v114, %v110
  %v171 = vpack.c.b16 %v119, %v115
  %v172 = vpack.c.b16 %v120, %v116
  %v173 = vpack.c.b16 %v121, %v117
  %v174 = vpack.c.b16 %v122, %v118
  %v175 = vpack.c.b16 %v127, %v123
  %v176 = vpack.c.b16 %v128, %v124
  %v177 = vpack.c.b16 %v129, %v125
  %v178 = vpack.c.b16 %v130, %v126
  %v179 = vpack.c.b16 %v135, %v131
  %v180 = vpack.c.b16 %v136, %v132
  %v181 = vpack.c.b16 %v137, %v133
  %v182 = vpack.c.b16 %v138, %v134
  %v183 = vpack.c.b16 %v143, %v139
  %v184 = vpack.c.b16 %v144, %v140
  %v185 = vpack.c.b16 %v145, %v141
  %v186 = vpack.c.b16 %v146, %v142
  %v187 = vpack.c.b16 %v151, %v147
  %v188 = vpack.c.b16 %v152, %v148
  %v189 = vpack.c.b16 %v153, %v149
  %v190 = vpack.c.b16 %v154, %v150
  %v191 = vpack.c.b16 %v159, %v155
  %v192 = vpack.c.b16 %v160, %v156
  %v193 = vpack.c.b16 %v161, %v157
  %v194 = vpack.c.b16 %v162, %v158
  %227 = vmatprep.subr.bf16.mxu0 %v164
  %228 = vmatpush1.bf16.msra.mxu0 %v163
  %229 = vmatprep.subr.bf16.mxu0 %v168
  %230 = vmatpush1.bf16.msra.mxu0 %v167
  %231 = vmatprep.subr.bf16.mxu0 %v172
  %232 = vmatpush1.bf16.msra.mxu0 %v171
  %233 = vmatprep.subr.bf16.mxu0 %v176
  %234 = vmatpush1.bf16.msra.mxu0 %v175
  %235 = vmatprep.subr.bf16.mxu0 %v180
  %236 = vmatpush1.bf16.msra.mxu0 %v179
  %237 = vmatprep.subr.bf16.mxu0 %v184
  %238 = vmatpush1.bf16.msra.mxu0 %v183
  %239 = vmatprep.subr.bf16.mxu0 %v188
  %240 = vmatpush1.bf16.msra.mxu0 %v187
  %241 = vmatprep.subr.bf16.mxu0 %v192
  %242 = vmatpush1.bf16.msra.mxu0 %v191
  %243 = vmatprep.subr.bf16.mxu0 0
  %244 = vmatpush1.bf16.msra.mxu0 0
  %245 = vmatprep.subr.bf16.mxu0 0
  %246 = vmatpush1.bf16.msra.mxu0 0
  %247 = vmatprep.subr.bf16.mxu0 0
  %248 = vmatpush1.bf16.msra.mxu0 0
  %249 = vmatprep.subr.bf16.mxu0 0
  %250 = vmatpush1.bf16.msra.mxu0 0
  %251 = vmatprep.subr.bf16.mxu0 0
  %252 = vmatpush1.bf16.msra.mxu0 0
  %253 = vmatprep.subr.bf16.mxu0 0
  %254 = vmatpush1.bf16.msra.mxu0 0
  %255 = vmatprep.subr.bf16.mxu0 0
  %256 = vmatpush1.bf16.msra.mxu0 0
  %257 = vmatprep.subr.bf16.mxu0 0
  %258 = vmatpush1.bf16.msra.mxu0 0
  %259 = vmatprep.mubr.bf16.mxu0 0
  %260 = vmatmul.mubr.bf16.gmra.mrb[0].mxu0 %v65
  %v261 = vpop.f32.mrb[0].mxu0
  %v262 = vadd.f32 %v54, %v261
  %v263 = vpop.f32.mrb[0].mxu0
  %v264 = vadd.f32 %v54, %v263
  %v265 = vpop.f32.mrb[0].mxu0
  %v266 = vadd.f32 %v59, %v265
  %v267 = vpop.f32.mrb[0].mxu0
  %v268 = vadd.f32 %v59, %v267
  %269 = vdwg.mxu0
  %270 = vmatprep.subr.bf16.mxu0 %v166
  %271 = vmatpush1.bf16.msra.mxu0 %v165
  %272 = vmatprep.subr.bf16.mxu0 %v170
  %273 = vmatpush1.bf16.msra.mxu0 %v169
  %274 = vmatprep.subr.bf16.mxu0 %v174
  %275 = vmatpush1.bf16.msra.mxu0 %v173
  %276 = vmatprep.subr.bf16.mxu0 %v178
  %277 = vmatpush1.bf16.msra.mxu0 %v177
  %278 = vmatprep.subr.bf16.mxu0 %v182
  %279 = vmatpush1.bf16.msra.mxu0 %v181
  %280 = vmatprep.subr.bf16.mxu0 %v186
  %281 = vmatpush1.bf16.msra.mxu0 %v185
  %282 = vmatprep.subr.bf16.mxu0 %v190
  %283 = vmatpush1.bf16.msra.mxu0 %v189
  %284 = vmatprep.subr.bf16.mxu0 %v194
  %285 = vmatpush1.bf16.msra.mxu0 %v193
  %286 = vmatprep.subr.bf16.mxu0 0
  %287 = vmatpush1.bf16.msra.mxu0 0
  %288 = vmatprep.subr.bf16.mxu0 0
  %289 = vmatpush1.bf16.msra.mxu0 0
  %290 = vmatprep.subr.bf16.mxu0 0
  %291 = vmatpush1.bf16.msra.mxu0 0
  %292 = vmatprep.subr.bf16.mxu0 0
  %293 = vmatpush1.bf16.msra.mxu0 0
  %294 = vmatprep.subr.bf16.mxu0 0
  %295 = vmatpush1.bf16.msra.mxu0 0
  %296 = vmatprep.subr.bf16.mxu0 0
  %297 = vmatpush1.bf16.msra.mxu0 0
  %298 = vmatprep.subr.bf16.mxu0 0
  %299 = vmatpush1.bf16.msra.mxu0 0
  %300 = vmatprep.subr.bf16.mxu0 0
  %301 = vmatpush1.bf16.msra.mxu0 0
  %302 = vmatprep.mubr.bf16.mxu0 0
  %303 = vmatmul.mubr.bf16.gmra.mrb[0].mxu0 %v65
  %v304 = vpop.f32.mrb[0].mxu0
  %v305 = vadd.f32 %v54, %v304
  %v306 = vpop.f32.mrb[0].mxu0
  %v307 = vadd.f32 %v54, %v306
  %v308 = vpop.f32.mrb[0].mxu0
  %v309 = vadd.f32 %v59, %v308
  %v310 = vpop.f32.mrb[0].mxu0
  %v311 = vadd.f32 %v59, %v310
  %312 = vdwg.mxu0
  %vm313 = vcmp.ge.f32.partialorder %v262, 0.0
  %vm314 = vcmp.ge.f32.partialorder %v264, 0.0
  %vm315 = vcmp.ge.f32.partialorder %v305, 0.0
  %vm316 = vcmp.ge.f32.partialorder %v307, 0.0
  %vm317 = vcmp.ge.f32.partialorder %v266, 0.0
  %vm318 = vcmp.ge.f32.partialorder %v268, 0.0
  %vm319 = vcmp.ge.f32.partialorder %v309, 0.0
  %vm320 = vcmp.ge.f32.partialorder %v311, 0.0
  %v321 = vmul.f32 %v262, 0.2
  %v322 = vmul.f32 %v264, 0.2
  %v323 = vmul.f32 %v305, 0.2
  %v324 = vmul.f32 %v307, 0.2
  %v325 = vmul.f32 %v266, 0.2
  %v326 = vmul.f32 %v268, 0.2
  %v327 = vmul.f32 %v309, 0.2
  %v328 = vmul.f32 %v311, 0.2
  %v329 = vsel %vm313, %v262, %v321
  %v330 = vsel %vm314, %v264, %v322
  %v331 = vsel %vm315, %v305, %v323
  %v332 = vsel %vm316, %v307, %v324
  %v333 = vsel %vm317, %v266, %v325
  %v334 = vsel %vm318, %v268, %v326
  %v335 = vsel %vm319, %v309, %v327
  %v336 = vsel %vm320, %v311, %v328
  %337 = vst [vmem:[%s3] sm:$0xff] %v329
  %338 = vst [vmem:[%s3 + $0x8] sm:$0xff] %v330
  %339 = vst [vmem:[%s3 + $0x10] sm:$0xff] %v331
  %340 = vst [vmem:[%s3 + $0x18] sm:$0xff] %v332
  %341 = vst [vmem:[%s3 + $0x20] sm:$0xff] %v333
  %342 = vst [vmem:[%s3 + $0x28] sm:$0xff] %v334
  %343 = vst [vmem:[%s3 + $0x30] sm:$0xff] %v335
  %344 = vst [vmem:[%s3 + $0x38] sm:$0xff] %v336
  // Predicated region
  $region14: #{_lambda_.4} parent=0 // pred_check
    _
  $region15: #{_lambda_.4} parent=0 // pred_check_branch
    %346 = sbr.rel (0) target = $region17
  $region16: #{_lambda_.4} parent=0 // pred_region
    _
  $region17: #{_lambda_.4} parent=0 // pred_fallthru
    _
  // Predicated region
  $region18: #{_lambda_.4} parent=0 // pred_check
    _
  $region19: #{_lambda_.4} parent=0 // pred_check_branch
    %348 = sbr.rel (0) target = $region21
  $region20: #{_lambda_.4} parent=0 // pred_region
    _
  $region21: #{_lambda_.4} parent=0 // pred_fallthru
    _

// kernel: _lambda_.5
$region0: #{_lambda_.5}
  #allocation0 [shape = 'u32[]', space=smem, size = 0x4, offset = 0x4, fixed_abs, tag = 'smem constant byte address 0x4 - core index']
  #allocation1 [shape = 'u32[144,128]{1,0:T(1,128)}', space=vmem, size = 0x12000, scoped, tag = 'internal scratch']
  #allocation2 [shape = 'f32[1,1]{1,0:T(1,128)S(1)}', space=vmem, size = 0x200, scoped, tag = 'scoped memory for _lambda_.5']
  %s0 = inlined_call_operand.vmem [shape: f32[2,4096], index: 0, kind: input, shape index: {}]
  %s1 = inlined_call_operand.vmem [shape: f32[1,4096], index: 1, kind: input, shape index: {}]
  %s2 = inlined_call_operand.<no memory space> [shape: f32[1,1], index: 2, kind: input, shape index: {}]
  %s3 = inlined_call_operand.vmem [shape: f32[2,1], index: 3, kind: output, shape index: {}]
  %s4 = sld [smem:[#allocation0]]
  $region53: #{_lambda_.5} parent=0
    _
  %s6 = ssub.s32 1, %s4
  %s7 = scalar_select 0, %s6, %s4
  %v8 = vstv %s2
  %9 = vst [vmem:[#allocation2] sm:$0x1] %v8
  loop: start=0, step=1, limit=4
  $region2: #{_lambda_.5} parent=0 // loop_pre_header
    _
  $region3: #{_lambda_.5} parent=0 // loop_header
    %s11 = sphi 0, %s15
    %p12 = scmp.ge.s32.totalorder %s11, 4
    %s21 = sphi 0, %s23
    %s24 = sphi 0, %s21
    %s25 = sphi 0, %s24
    %s41 = sphi 0, %s25
    %s47 = sphi 0, %s49
    %s50 = sphi 0, %s47
    %s51 = sphi 0, %s50
    %s67 = sphi 0, %s51
    %s71 = sphi 0, %s71
    %s73 = sphi 0, %s71
    %s74 = sphi 0, %s73
    %s88 = sphi 0, %s74
    %s92 = sphi 0, %s92
    %s94 = sphi 0, %s92
    %s95 = sphi 0, %s94
    %s109 = sphi 0, %s95
  $region4: #{_lambda_.5} parent=0 // loop_header_branch
    %14 = sbr.rel (%p12) target = $region8
  $region5: #{_lambda_.5} parent=0 // loop_body
    %s16 = ssub.s32 %s11, 1
    %s17 = ssub.s32 %s11, 2
    %s18 = sadd.s32 %s11, 1
    %s19 = ssub.s32 %s11, %s18
    %p20 = scmp.eq.s32.totalorder %s19, 0
    %s22 = sadd.s32 %s21, 1
    %s23 = scalar_select %p20, %s21, %s22
    %p26 = pneg %p20
    %p27 = scmp.eq.s32.totalorder %s11, 1
    %p28 = por %p26, %p27
    %p29 = scmp.ne.s32.totalorder %s21, %s24
    %p30 = scmp.eq.s32.totalorder %s11, 0
    %p31 = por %p29, %p30
    %p32 = scmp.ne.s32.totalorder %s21, %s24
    %p33 = scmp.eq.s32.totalorder %s16, 1
    %p34 = por %p32, %p33
    %p35 = scmp.ne.s32.totalorder %s24, %s25
    %p36 = scmp.eq.s32.totalorder %s16, 0
    %p37 = por %p35, %p36
    %p38 = scmp.ne.s32.totalorder %s24, %s25
    %p39 = scmp.eq.s32.totalorder %s17, 1
    %p40 = por %p38, %p39
    %p42 = scmp.ne.s32.totalorder %s25, %s41
    %p43 = scmp.eq.s32.totalorder %s17, 0
    %p44 = por %p42, %p43
    %s45 = ssub.s32 %s11, %s18
    %p46 = scmp.eq.s32.totalorder %s45, 0
    %s48 = sadd.s32 %s47, 1
    %s49 = scalar_select %p46, %s47, %s48
    %p52 = pneg %p46
    %p53 = scmp.eq.s32.totalorder %s11, 1
    %p54 = por %p52, %p53
    %p55 = scmp.ne.s32.totalorder %s47, %s50
    %p56 = scmp.eq.s32.totalorder %s11, 0
    %p57 = por %p55, %p56
    %p58 = scmp.ne.s32.totalorder %s47, %s50
    %p59 = scmp.eq.s32.totalorder %s16, 1
    %p60 = por %p58, %p59
    %p61 = scmp.ne.s32.totalorder %s50, %s51
    %p62 = scmp.eq.s32.totalorder %s16, 0
    %p63 = por %p61, %p62
    %p64 = scmp.ne.s32.totalorder %s50, %s51
    %p65 = scmp.eq.s32.totalorder %s17, 1
    %p66 = por %p64, %p65
    %p68 = scmp.ne.s32.totalorder %s51, %s67
    %p69 = scmp.eq.s32.totalorder %s17, 0
    %p70 = por %p68, %p69
    %s72 = sadd.s32 %s71, 1
    %p75 = scmp.eq.s32.totalorder %s11, 1
    %p76 = scmp.ne.s32.totalorder %s71, %s73
    %p77 = scmp.eq.s32.totalorder %s11, 0
    %p78 = por %p76, %p77
    %p79 = scmp.ne.s32.totalorder %s71, %s73
    %p80 = scmp.eq.s32.totalorder %s16, 1
    %p81 = por %p79, %p80
    %p82 = scmp.ne.s32.totalorder %s73, %s74
    %p83 = scmp.eq.s32.totalorder %s16, 0
    %p84 = por %p82, %p83
    %p85 = scmp.ne.s32.totalorder %s73, %s74
    %p86 = scmp.eq.s32.totalorder %s17, 1
    %p87 = por %p85, %p86
    %p89 = scmp.ne.s32.totalorder %s74, %s88
    %p90 = scmp.eq.s32.totalorder %s17, 0
    %p91 = por %p89, %p90
    %s93 = sadd.s32 %s92, 1
    %p96 = scmp.eq.s32.totalorder %s11, 1
    %p97 = scmp.ne.s32.totalorder %s92, %s94
    %p98 = scmp.eq.s32.totalorder %s11, 0
    %p99 = por %p97, %p98
    %p100 = scmp.ne.s32.totalorder %s92, %s94
    %p101 = scmp.eq.s32.totalorder %s16, 1
    %p102 = por %p100, %p101
    %p103 = scmp.ne.s32.totalorder %s94, %s95
    %p104 = scmp.eq.s32.totalorder %s16, 0
    %p105 = por %p103, %p104
    %p106 = scmp.ne.s32.totalorder %s94, %s95
    %p107 = scmp.eq.s32.totalorder %s17, 1
    %p108 = por %p106, %p107
    %p110 = scmp.ne.s32.totalorder %s95, %s109
    %p111 = scmp.eq.s32.totalorder %s17, 0
    %p112 = por %p110, %p111
    %p113 = scmp.le.s32.totalorder 1, %s11
    %p114 = scmp.lt.s32.totalorder %s11, 3
    %p115 = pnand %p113, %p114
    %p116 = pneg %p115
    // Predicated region
    $region9: #{_lambda_.5} parent=5 // pred_check
      _
    $region10: #{_lambda_.5} parent=5 // pred_check_branch
      %118 = sbr.rel (%p115) target = $region12
    $region11: #{_lambda_.5} parent=5 // pred_region
      %s119 = ssub.s32 %s11, 1
      // Predicated region
      $region13: #{_lambda_.5} parent=11 // pred_check
        %p120 = pneg %p84
      $region14: #{_lambda_.5} parent=11 // pred_check_branch
        %122 = sbr.rel (%p120) target = $region16
      $region15: #{_lambda_.5} parent=11 // pred_region
        _
      $region16: #{_lambda_.5} parent=11 // pred_fallthru
        _
    $region12: #{_lambda_.5} parent=5 // pred_fallthru
      _
    %p123 = scmp.lt.s32.totalorder %s11, 2
    // Predicated region
    $region17: #{_lambda_.5} parent=5 // pred_check
      %p124 = pneg %p123
    $region18: #{_lambda_.5} parent=5 // pred_check_branch
      %126 = sbr.rel (%p124) target = $region20
    $region19: #{_lambda_.5} parent=5 // pred_region
      // Predicated region
      $region21: #{_lambda_.5} parent=19 // pred_check
        %p127 = pneg %p31
      $region22: #{_lambda_.5} parent=19 // pred_check_branch
        %129 = sbr.rel (%p127) target = $region24
      $region23: #{_lambda_.5} parent=19 // pred_region
        %s130 = smul.u32 16, %s11
        %p131 = scmp.lt.s32.totalorder %s130, 31
        %s132 = scalar_select %p131, %s130, 31
        %s133 = smul.addr %s132, 2
        %s134 = scalar_lea.vmem %s0, %s133
        %s135 = smul.u32 16, %s11
      $region24: #{_lambda_.5} parent=19 // pred_fallthru
        _
      // Predicated region
      $region25: #{_lambda_.5} parent=19 // pred_check
        %p136 = pneg %p57
      $region26: #{_lambda_.5} parent=19 // pred_check_branch
        %138 = sbr.rel (%p136) target = $region28
      $region27: #{_lambda_.5} parent=19 // pred_region
        %s139 = smul.u32 16, %s11
        %p140 = scmp.lt.s32.totalorder %s139, 31
        %s141 = scalar_select %p140, %s139, 31
        %s142 = scalar_lea.vmem %s1, %s141
        %s143 = smul.u32 16, %s11
      $region28: #{_lambda_.5} parent=19 // pred_fallthru
        _
    $region20: #{_lambda_.5} parent=5 // pred_fallthru
      _
    %p144 = scmp.le.s32.totalorder 1, %s11
    %p145 = scmp.lt.s32.totalorder %s11, 3
    %p146 = pnand %p144, %p145
    %p147 = pneg %p146
    // Predicated region
    $region29: #{_lambda_.5} parent=5 // pred_check
      _
    $region30: #{_lambda_.5} parent=5 // pred_check_branch
      %149 = sbr.rel (%p146) target = $region32
    $region31: #{_lambda_.5} parent=5 // pred_region
      %s150 = ssub.s32 %s11, 1
      %s151 = smul.u32 16, %s16
      %p152 = scmp.lt.s32.totalorder %s151, 31
      %s153 = scalar_select %p152, %s151, 31
      %s154 = smul.addr %s153, 2
      %s155 = scalar_lea.vmem %s0, %s154
      %p156 = pneg %p37
      %p157 = pneg %p34
      %s158 = smul.u32 16, %s16
      %p159 = scmp.lt.s32.totalorder %s158, 31
      %s160 = scalar_select %p159, %s158, 31
      %s161 = scalar_lea.vmem %s1, %s160
      %p162 = pneg %p63
      %p163 = pneg %p60
      %p164 = pneg %p84
      %p165 = pneg %p81
      %p166 = pneg %p105
      %p167 = pneg %p102
      %s168 = smul.u32 16, %s16
      %p169 = scmp.lt.s32.totalorder %s168, 31
      %s170 = scalar_select %p169, %s168, 31
      %s171 = smul.addr %s170, 2
      %s172 = scalar_lea.vmem %s0, %s171
      %s173 = smul.u32 16, %s16
      %s174 = smul.u32 16, %s16
      %p175 = scmp.lt.s32.totalorder %s174, 31
      %s176 = scalar_select %p175, %s174, 31
      %s177 = scalar_lea.vmem %s1, %s176
      %s178 = smul.u32 16, %s16
      %p179 = scmp.eq.s32.totalorder %s16, 0
      // Predicated region
      $region33: #{_lambda_.5} parent=31 // pred_check
        %p180 = pneg %p179
      $region34: #{_lambda_.5} parent=31 // pred_check_branch
        %182 = sbr.rel (%p180) target = $region36
      $region35: #{_lambda_.5} parent=31 // pred_region
        %vm183 = vcmask 1024
        %184 = vst.msk [vmem:[%s3] sm:$0x3] %vm183, 0.0
      $region36: #{_lambda_.5} parent=31 // pred_fallthru
        _
      %v185 = vld [vmem:[%s3] sm:$0x3]
      %v186 = vld [vmem:[%s172] sm:$0xff]
      %v187 = vld [vmem:[%s172 + $0x8] sm:$0xff]
      %v188 = vld [vmem:[%s172 + $0x10] sm:$0xff]
      %v189 = vld [vmem:[%s172 + $0x18] sm:$0xff]
      %v190 = vld [vmem:[%s177] sm:$0xff]
      %v191 = vld [vmem:[%s177 + $0x8] sm:$0xff]
      %v194 = vlaneseq
      %v195 = vshrl.u32 %v194, 7
      %v196 = vsub.s32 0, %v195
      %v197 = vrot.slane %v190, %v196
      %v198 = vlaneseq
      %v199 = vshrl.u32 %v198, 7
      %v200 = vsub.s32 1, %v199
      %v201 = vrot.slane %v190, %v200
      %v202 = vlaneseq
      %v203 = vshrl.u32 %v202, 7
      %v204 = vsub.s32 2, %v203
      %v205 = vrot.slane %v190, %v204
      %v206 = vlaneseq
      %v207 = vshrl.u32 %v206, 7
      %v208 = vsub.s32 3, %v207
      %v209 = vrot.slane %v190, %v208
      %v210 = vlaneseq
      %v211 = vshrl.u32 %v210, 7
      %v212 = vsub.s32 4, %v211
      %v213 = vrot.slane %v190, %v212
      %v214 = vlaneseq
      %v215 = vshrl.u32 %v214, 7
      %v216 = vsub.s32 5, %v215
      %v217 = vrot.slane %v190, %v216
      %v218 = vlaneseq
      %v219 = vshrl.u32 %v218, 7
      %v220 = vsub.s32 6, %v219
      %v221 = vrot.slane %v190, %v220
      %v222 = vlaneseq
      %v223 = vshrl.u32 %v222, 7
      %v224 = vsub.s32 7, %v223
      %v225 = vrot.slane %v190, %v224
      %v226 = vlaneseq
      %v227 = vshrl.u32 %v226, 7
      %v228 = vsub.s32 0, %v227
      %v229 = vrot.slane %v191, %v228
      %v230 = vlaneseq
      %v231 = vshrl.u32 %v230, 7
      %v232 = vsub.s32 1, %v231
      %v233 = vrot.slane %v191, %v232
      %v234 = vlaneseq
      %v235 = vshrl.u32 %v234, 7
      %v236 = vsub.s32 2, %v235
      %v237 = vrot.slane %v191, %v236
      %v238 = vlaneseq
      %v239 = vshrl.u32 %v238, 7
      %v240 = vsub.s32 3, %v239
      %v241 = vrot.slane %v191, %v240
      %v242 = vlaneseq
      %v243 = vshrl.u32 %v242, 7
      %v244 = vsub.s32 4, %v243
      %v245 = vrot.slane %v191, %v244
      %v246 = vlaneseq
      %v247 = vshrl.u32 %v246, 7
      %v248 = vsub.s32 5, %v247
      %v249 = vrot.slane %v191, %v248
      %v250 = vlaneseq
      %v251 = vshrl.u32 %v250, 7
      %v252 = vsub.s32 6, %v251
      %v253 = vrot.slane %v191, %v252
      %v254 = vlaneseq
      %v255 = vshrl.u32 %v254, 7
      %v256 = vsub.s32 7, %v255
      %v257 = vrot.slane %v191, %v256
      %v258 = vcombine.low %v197, %v201
      %v259 = vcombine.low %v205, %v209
      %v261 = vunpack.c.l.s4 1983009808
      %v262 = vunpack.c.0.s8 %v261
      %v263 = vlaneseq
      %v264 = vshrl.u32 %v263, 7
      %v265 = vsub.s32 %v262, %v264
      %v266 = vrot.slane %v258, %v265
      %v268 = vunpack.c.l.s4 1983009808
      %v269 = vunpack.c.0.s8 %v268
      %v270 = vlaneseq
      %v271 = vshrl.u32 %v270, 7
      %v272 = vsub.s32 %v269, %v271
      %v273 = vrot.slane %v259, %v272
      %v274 = vcombine.low %v266, %v273
      %v275 = vcombine.low %v213, %v217
      %v276 = vcombine.low %v221, %v225
      %v278 = vunpack.c.l.s4 1983009808
      %v279 = vunpack.c.0.s8 %v278
      %v280 = vlaneseq
      %v281 = vshrl.u32 %v280, 7
      %v282 = vsub.s32 %v279, %v281
      %v283 = vrot.slane %v275, %v282
      %v285 = vunpack.c.l.s4 1983009808
      %v286 = vunpack.c.0.s8 %v285
      %v287 = vlaneseq
      %v288 = vshrl.u32 %v287, 7
      %v289 = vsub.s32 %v286, %v288
      %v290 = vrot.slane %v276, %v289
      %v291 = vcombine.low %v283, %v290
      %v292 = vcombine.low %v229, %v233
      %v293 = vcombine.low %v237, %v241
      %v295 = vunpack.c.l.s4 1983009808
      %v296 = vunpack.c.0.s8 %v295
      %v297 = vlaneseq
      %v298 = vshrl.u32 %v297, 7
      %v299 = vsub.s32 %v296, %v298
      %v300 = vrot.slane %v292, %v299
      %v302 = vunpack.c.l.s4 1983009808
      %v303 = vunpack.c.0.s8 %v302
      %v304 = vlaneseq
      %v305 = vshrl.u32 %v304, 7
      %v306 = vsub.s32 %v303, %v305
      %v307 = vrot.slane %v293, %v306
      %v308 = vcombine.low %v300, %v307
      %v309 = vcombine.low %v245, %v249
      %v310 = vcombine.low %v253, %v257
      %v312 = vunpack.c.l.s4 1983009808
      %v313 = vunpack.c.0.s8 %v312
      %v314 = vlaneseq
      %v315 = vshrl.u32 %v314, 7
      %v316 = vsub.s32 %v313, %v315
      %v317 = vrot.slane %v309, %v316
      %v319 = vunpack.c.l.s4 1983009808
      %v320 = vunpack.c.0.s8 %v319
      %v321 = vlaneseq
      %v322 = vshrl.u32 %v321, 7
      %v323 = vsub.s32 %v320, %v322
      %v324 = vrot.slane %v310, %v323
      %v325 = vcombine.low %v317, %v324
      %v330 = vmul.f32 %v186, %v274
      %v331 = vmul.f32 %v187, %v291
      %v332 = vmul.f32 %v188, %v308
      %v333 = vmul.f32 %v189, %v325
      %v338 = vcombine.high %v330, %v330
      %v340 = vunpack.c.l.s4 1983009808
      %v341 = vunpack.c.0.s8 %v340
      %v342 = vlaneseq
      %v343 = vshrl.u32 %v342, 7
      %v344 = vsub.s32 %v341, %v343
      %v345 = vrot.slane %v330, %v344
      %v347 = vunpack.c.l.s4 1983009808
      %v348 = vunpack.c.0.s8 %v347
      %v349 = vlaneseq
      %v350 = vshrl.u32 %v349, 7
      %v351 = vsub.s32 %v348, %v350
      %v352 = vrot.slane %v338, %v351
      %v353 = vcombine.high %v345, %v345
      %v354 = vcombine.high %v352, %v352
      %v355 = vcombine.high %v331, %v331
      %v357 = vunpack.c.l.s4 1983009808
      %v358 = vunpack.c.0.s8 %v357
      %v359 = vlaneseq
      %v360 = vshrl.u32 %v359, 7
      %v361 = vsub.s32 %v358, %v360
      %v362 = vrot.slane %v331, %v361
      %v364 = vunpack.c.l.s4 1983009808
      %v365 = vunpack.c.0.s8 %v364
      %v366 = vlaneseq
      %v367 = vshrl.u32 %v366, 7
      %v368 = vsub.s32 %v365, %v367
      %v369 = vrot.slane %v355, %v368
      %v370 = vcombine.high %v362, %v362
      %v371 = vcombine.high %v369, %v369
      %v372 = vcombine.high %v332, %v332
      %v374 = vunpack.c.l.s4 1983009808
      %v375 = vunpack.c.0.s8 %v374
      %v376 = vlaneseq
      %v377 = vshrl.u32 %v376, 7
      %v378 = vsub.s32 %v375, %v377
      %v379 = vrot.slane %v332, %v378
      %v381 = vunpack.c.l.s4 1983009808
      %v382 = vunpack.c.0.s8 %v381
      %v383 = vlaneseq
      %v384 = vshrl.u32 %v383, 7
      %v385 = vsub.s32 %v382, %v384
      %v386 = vrot.slane %v372, %v385
      %v387 = vcombine.high %v379, %v379
      %v388 = vcombine.high %v386, %v386
      %v389 = vcombine.high %v333, %v333
      %v391 = vunpack.c.l.s4 1983009808
      %v392 = vunpack.c.0.s8 %v391
      %v393 = vlaneseq
      %v394 = vshrl.u32 %v393, 7
      %v395 = vsub.s32 %v392, %v394
      %v396 = vrot.slane %v333, %v395
      %v398 = vunpack.c.l.s4 1983009808
      %v399 = vunpack.c.0.s8 %v398
      %v400 = vlaneseq
      %v401 = vshrl.u32 %v400, 7
      %v402 = vsub.s32 %v399, %v401
      %v403 = vrot.slane %v389, %v402
      %v404 = vcombine.high %v396, %v396
      %v405 = vcombine.high %v403, %v403
      %vm422 = vcmask 1041408
      %v423 = vsel %vm422, %v345, 0.0
      %v424 = vsel %vm422, %v353, 0.0
      %v425 = vadd.f32 %v423, %v424
      %v426 = vsel %vm422, %v352, 0.0
      %v427 = vadd.f32 %v425, %v426
      %v428 = vsel %vm422, %v354, 0.0
      %v429 = vadd.f32 %v427, %v428
      %v430 = vsel %vm422, %v362, 0.0
      %v431 = vadd.f32 %v429, %v430
      %v432 = vsel %vm422, %v370, 0.0
      %v433 = vadd.f32 %v431, %v432
      %v434 = vsel %vm422, %v369, 0.0
      %v435 = vadd.f32 %v433, %v434
      %v436 = vsel %vm422, %v371, 0.0
      %v437 = vadd.f32 %v435, %v436
      %v438 = vsel %vm422, %v379, 0.0
      %v439 = vadd.f32 %v437, %v438
      %v440 = vsel %vm422, %v387, 0.0
      %v441 = vadd.f32 %v439, %v440
      %v442 = vsel %vm422, %v386, 0.0
      %v443 = vadd.f32 %v441, %v442
      %v444 = vsel %vm422, %v388, 0.0
      %v445 = vadd.f32 %v443, %v444
      %v446 = vsel %vm422, %v396, 0.0
      %v447 = vadd.f32 %v445, %v446
      %v448 = vsel %vm422, %v404, 0.0
      %v449 = vadd.f32 %v447, %v448
      %v450 = vsel %vm422, %v403, 0.0
      %v451 = vadd.f32 %v449, %v450
      %v452 = vsel %vm422, %v405, 0.0
      %v453 = vadd.f32 %v451, %v452
      %454 = vadd.xlane.f32.xlu0 %v453
      %v455 = vpop.xlane.xlu0 %454
      %v456 = vadd.f32 %v185, %v455
      %vm457 = vcmask 1024
      %458 = vst.msk [vmem:[%s3] sm:$0x3] %vm457, %v456
      %p459 = scmp.eq.s32.totalorder %s16, 1
      // Predicated region
      $region37: #{_lambda_.5} parent=31 // pred_check
        %p460 = pneg %p459
      $region38: #{_lambda_.5} parent=31 // pred_check_branch
        %462 = sbr.rel (%p460) target = $region40
      $region39: #{_lambda_.5} parent=31 // pred_region
        %v463 = vld [vmem:[%s3] sm:$0x3]
        %v464 = vld [vmem:[#allocation2] sm:$0x1]
        %v466 = vlaneseq
        %v467 = vshrl.u32 %v466, 7
        %v468 = vsub.s32 0, %v467
        %v469 = vrot.slane %v464, %v468
        %v471 = vadd.f32 %v463, %v469
        %472 = vst.msk [vmem:[%s3] sm:$0x3] %vm457, %v471
      $region40: #{_lambda_.5} parent=31 // pred_fallthru
        _
      // Predicated region
      $region41: #{_lambda_.5} parent=31 // pred_check
        %p473 = pneg %p102
      $region42: #{_lambda_.5} parent=31 // pred_check_branch
        %475 = sbr.rel (%p473) target = $region44
      $region43: #{_lambda_.5} parent=31 // pred_region
        _
      $region44: #{_lambda_.5} parent=31 // pred_fallthru
        _
      // Predicated region
      $region45: #{_lambda_.5} parent=31 // pred_check
        %p476 = pneg %p102
      $region46: #{_lambda_.5} parent=31 // pred_check_branch
        %478 = sbr.rel (%p476) target = $region48
      $region47: #{_lambda_.5} parent=31 // pred_region
        _
      $region48: #{_lambda_.5} parent=31 // pred_fallthru
        _
    $region32: #{_lambda_.5} parent=5 // pred_fallthru
      _
    %p479 = scmp.le.s32.totalorder 2, %s11
    // Predicated region
    $region49: #{_lambda_.5} parent=5 // pred_check
      %p480 = pneg %p479
    $region50: #{_lambda_.5} parent=5 // pred_check_branch
      %482 = sbr.rel (%p480) target = $region52
    $region51: #{_lambda_.5} parent=5 // pred_region
      %s483 = ssub.s32 %s11, 2
    $region52: #{_lambda_.5} parent=5 // pred_fallthru
      _
  $region6: #{_lambda_.5} parent=0 // loop_footer
    %s15 = sadd.s32 1, %s11
  $region7: #{_lambda_.5} parent=0 // loop_footer_branch
    %10 = sbr.rel target = $region3
  $region8: #{_lambda_.5} parent=0 // loop_exit
    _

</llo_original>
